<compile_context>
chip_gen: v6e
topology: v6e:2x2x1
jax: 0.10.0
libtpu: 0.0.40
codegen_flags: <defaults>
</compile_context>

<pallas_src>
import jax
import jax.numpy as jnp
from jax.experimental import pallas as pl
from jax.experimental.pallas import tpu as pltpu


def boundary_loss(pred, gt, *, theta0=3, theta=5, epsilon=1e-7):
    """pred: (N, C, H, W) float logits, gt: (N, H, W) int labels. Returns scalar f32."""
    N, C, H, W = pred.shape
    if H != W:
        raise ValueError("reference one_hot(gt).transpose(1, 3) requires H == W")
    if theta0 % 2 != 1 or theta % 2 != 1:
        raise ValueError("theta0 / theta must be odd (stride-1 'same' max pooling)")
    S = H
    r0 = (theta0 - 1) // 2          # pad of the first (3x3) pool
    r1 = (theta - 1) // 2           # pad of the second (5x5) pool

    def kernel(pred_ref, gt_ref, out_ref):
        # ---- separable stride-1 max pool via zero-padded static shifts --------
        # shifted[i, j] = x[i + d, j] (rows) / x[i, j + d] (cols), 0 outside the
        # image.  Zero fill is equivalent to -inf fill because x >= 0 and the
        # window always contains its centre element.  Pure VPU/XLU work, no MXU.
        def maxpool(x, r):
            zr = jnp.zeros((r, S), jnp.float32)
            xp = jnp.concatenate([zr, x, zr], axis=0)            # (S + 2r, S)
            rows = x
            for d in range(-r, r + 1):
                if d == 0:
                    continue
                rows = jnp.maximum(rows, xp[r + d:r + d + S, :])
            zc = jnp.zeros((S, r), jnp.float32)
            rp = jnp.concatenate([zc, rows, zc], axis=1)          # (S, S + 2r)
            out = rows
            for d in range(-r, r + 1):
                if d == 0:
                    continue
                out = jnp.maximum(out, rp[:, r + d:r + d + S])
            return out

        # ---- two-pass softmax over the class axis (only m / inv_denom live) ---
        m = pred_ref[0, 0].astype(jnp.float32)
        for c in range(1, C):
            m = jnp.maximum(m, pred_ref[0, c].astype(jnp.float32))
        denom = jnp.zeros((S, S), jnp.float32)
        for c in range(C):
            denom = denom + jnp.exp(pred_ref[0, c].astype(jnp.float32) - m)
        inv_denom = pl.reciprocal(denom)                          # EUP; exact

        g = gt_ref[0]                       # (S, S) int32, spatially transposed gt

        # ---- per-class BF1 (unrolled class loop; fine for small C) ------------
        bf1_sum = jnp.float32(0.0)
        for c in range(C):
            p_c = jnp.exp(pred_ref[0, c].astype(jnp.float32) - m) * inv_denom
            one_m_oh = 1.0 - (g == c).astype(jnp.float32)   # 1 - y_onehot[:, c]  (W, H orientation)
            one_m_p = 1.0 - p_c                             # 1 - softmax[:, c]   (H, W orientation)

            gt_b = maxpool(one_m_oh, r0) - one_m_oh
            pred_b = maxpool(one_m_p, r0) - one_m_p
            gt_b_ext = maxpool(gt_b, r1)
            pred_b_ext = maxpool(pred_b, r1)

            P = jnp.sum(pred_b * gt_b_ext) / (jnp.sum(pred_b) + epsilon)
            R = jnp.sum(pred_b_ext * gt_b) / (jnp.sum(gt_b) + epsilon)
            bf1_sum = bf1_sum + 2.0 * P * R / (P + R + epsilon)

        # Lane-dense per-sample output block (splat of the per-sample BF1 sum).
        out_ref[...] = jnp.broadcast_to(bf1_sum, out_ref.shape).astype(jnp.float32)

    # one_hot(gt).transpose(1, 3) swaps H and W; equivalently feed the transposed gt.
    gt_t = jnp.swapaxes(gt.astype(jnp.int32), 1, 2)          # (N, W, H)

    bf1 = pl.pallas_call(
        kernel,
        out_shape=jax.ShapeDtypeStruct((N, 8, 128), jnp.float32),
        grid_spec=pltpu.PrefetchScalarGridSpec(
            num_scalar_prefetch=0,
            grid=(N,),
            in_specs=[
                pl.BlockSpec((1, C, S, S), lambda n: (n, 0, 0, 0)),   # native dtype pass-through
                pl.BlockSpec((1, S, S), lambda n: (n, 0, 0)),
            ],
            out_specs=pl.BlockSpec((1, 8, 128), lambda n: (n, 0, 0)),
        ),
        compiler_params=pltpu.CompilerParams(
            dimension_semantics=("parallel",),      # per-sample independent -> 2 TCs on v7x
            vmem_limit_bytes=64 * 1024 * 1024,      # v5e default scoped limit is only 16 MiB
        ),
    )(pred, gt_t)

    # mean(1 - BF1) over (N, C) == 1 - sum(per-sample BF1 sums) / (N * C)
    return 1.0 - jnp.sum(bf1[:, 0, 0]) / jnp.float32(N * C)


def boundary_loss_ref(pred, gt, theta0=3, theta=5, epsilon=1e-7):
    """Pure-JAX reference matching the PyTorch module (f32 math)."""
    n, c, h, w = pred.shape
    p = jax.nn.softmax(pred.astype(jnp.float32), axis=1)
    onehot = jax.nn.one_hot(gt, c, dtype=jnp.float32)        # (N, H, W, C)
    onehot = jnp.swapaxes(onehot, 1, 3)                      # (N, C, W, H)

    def mp(x, k):
        pad = (k - 1) // 2
        return jax.lax.reduce_window(
            x, -jnp.inf, jax.lax.max,
            (1, 1, k, k), (1, 1, 1, 1),
            [(0, 0), (0, 0), (pad, pad), (pad, pad)])

    gt_b = mp(1.0 - onehot, theta0) - (1.0 - onehot)
    pred_b = mp(1.0 - p, theta0) - (1.0 - p)
    gt_b_ext = mp(gt_b, theta)
    pred_b_ext = mp(pred_b, theta)

    gt_b = gt_b.reshape(n, c, -1)
    pred_b = pred_b.reshape(n, c, -1)
    gt_b_ext = gt_b_ext.reshape(n, c, -1)
    pred_b_ext = pred_b_ext.reshape(n, c, -1)

    P = jnp.sum(pred_b * gt_b_ext, axis=2) / (jnp.sum(pred_b, axis=2) + epsilon)
    R = jnp.sum(pred_b_ext * gt_b, axis=2) / (jnp.sum(gt_b, axis=2) + epsilon)
    BF1 = 2.0 * P * R / (P + R + epsilon)
    return jnp.mean(1.0 - BF1)


if __name__ == "__main__":
    key = jax.random.PRNGKey(0)
    k_pred, k_gt = jax.random.split(key)

    N, C, H, W = 2, 4, 16, 16
    pred = jax.random.normal(k_pred, (N, C, H, W), dtype=jnp.float32)
    gt = jax.random.randint(k_gt, (N, H, W), 0, C, dtype=jnp.int32)

    out = boundary_loss(pred, gt)
    jax.block_until_ready(out)

    ref = boundary_loss_ref(pred, gt)
    # All shift/pool math is now exact; tolerance only covers f32 reduction order
    # and exp/reciprocal rounding differences.
    assert jnp.allclose(out, ref, rtol=1e-3, atol=1e-3), (out, ref)

    print("KERNEL_OK")
</pallas_src>

<mosaic_0001>
module attributes {stable_mosaic.version = 11 : i64} {
  func.func @kernel(%arg0: i32, %arg1: memref<1x4x16x16xf32, #tpu.memory_space<vmem>>, %arg2: memref<1x16x16xi32, #tpu.memory_space<vmem>>, %arg3: memref<1x8x128xf32, #tpu.memory_space<vmem>>) attributes {dimension_semantics = [#tpu.dimension_semantics<parallel>], iteration_bounds = array<i64: 2>, scalar_prefetch = 0 : i64, scratch_operands = 0 : i64, tpu.core_type = #tpu.core_type<tc>, window_params = [{transform_indices = @transform_0, window_bounds = array<i64: 1, 4, 16, 16>}, {transform_indices = @transform_1, window_bounds = array<i64: 1, 16, 16>}, {transform_indices = @transform_2, window_bounds = array<i64: 1, 8, 128>}]} {
    %c0 = arith.constant 0 : index
    %c0_0 = arith.constant 0 : index
    %c0_1 = arith.constant 0 : index
    %c0_2 = arith.constant 0 : index
    %0 = vector.load %arg1[%c0, %c0_0, %c0_1, %c0_2] : memref<1x4x16x16xf32, #tpu.memory_space<vmem>>, vector<1x1x16x16xf32>
    %1 = vector.shape_cast %0 : vector<1x1x16x16xf32> to vector<16x16xf32>
    %c0_3 = arith.constant 0 : index
    %c1 = arith.constant 1 : index
    %c0_4 = arith.constant 0 : index
    %c0_5 = arith.constant 0 : index
    %2 = vector.load %arg1[%c0_3, %c1, %c0_4, %c0_5] : memref<1x4x16x16xf32, #tpu.memory_space<vmem>>, vector<1x1x16x16xf32>
    %3 = vector.shape_cast %2 : vector<1x1x16x16xf32> to vector<16x16xf32>
    %4 = arith.maximumf %1, %3 : vector<16x16xf32>
    %c0_6 = arith.constant 0 : index
    %c2 = arith.constant 2 : index
    %c0_7 = arith.constant 0 : index
    %c0_8 = arith.constant 0 : index
    %5 = vector.load %arg1[%c0_6, %c2, %c0_7, %c0_8] : memref<1x4x16x16xf32, #tpu.memory_space<vmem>>, vector<1x1x16x16xf32>
    %6 = vector.shape_cast %5 : vector<1x1x16x16xf32> to vector<16x16xf32>
    %7 = arith.maximumf %4, %6 : vector<16x16xf32>
    %c0_9 = arith.constant 0 : index
    %c3 = arith.constant 3 : index
    %c0_10 = arith.constant 0 : index
    %c0_11 = arith.constant 0 : index
    %8 = vector.load %arg1[%c0_9, %c3, %c0_10, %c0_11] : memref<1x4x16x16xf32, #tpu.memory_space<vmem>>, vector<1x1x16x16xf32>
    %9 = vector.shape_cast %8 : vector<1x1x16x16xf32> to vector<16x16xf32>
    %10 = arith.maximumf %7, %9 : vector<16x16xf32>
    %cst = arith.constant 0.000000e+00 : f32
    %11 = vector.broadcast %cst : f32 to vector<16x16xf32>
    %c0_12 = arith.constant 0 : index
    %c0_13 = arith.constant 0 : index
    %c0_14 = arith.constant 0 : index
    %c0_15 = arith.constant 0 : index
    %12 = vector.load %arg1[%c0_12, %c0_13, %c0_14, %c0_15] : memref<1x4x16x16xf32, #tpu.memory_space<vmem>>, vector<1x1x16x16xf32>
    %13 = vector.shape_cast %12 : vector<1x1x16x16xf32> to vector<16x16xf32>
    %14 = arith.subf %13, %10 : vector<16x16xf32>
    %15 = math.exp %14 : vector<16x16xf32>
    %16 = arith.addf %11, %15 : vector<16x16xf32>
    %c0_16 = arith.constant 0 : index
    %c1_17 = arith.constant 1 : index
    %c0_18 = arith.constant 0 : index
    %c0_19 = arith.constant 0 : index
    %17 = vector.load %arg1[%c0_16, %c1_17, %c0_18, %c0_19] : memref<1x4x16x16xf32, #tpu.memory_space<vmem>>, vector<1x1x16x16xf32>
    %18 = vector.shape_cast %17 : vector<1x1x16x16xf32> to vector<16x16xf32>
    %19 = arith.subf %18, %10 : vector<16x16xf32>
    %20 = math.exp %19 : vector<16x16xf32>
    %21 = arith.addf %16, %20 : vector<16x16xf32>
    %c0_20 = arith.constant 0 : index
    %c2_21 = arith.constant 2 : index
    %c0_22 = arith.constant 0 : index
    %c0_23 = arith.constant 0 : index
    %22 = vector.load %arg1[%c0_20, %c2_21, %c0_22, %c0_23] : memref<1x4x16x16xf32, #tpu.memory_space<vmem>>, vector<1x1x16x16xf32>
    %23 = vector.shape_cast %22 : vector<1x1x16x16xf32> to vector<16x16xf32>
    %24 = arith.subf %23, %10 : vector<16x16xf32>
    %25 = math.exp %24 : vector<16x16xf32>
    %26 = arith.addf %21, %25 : vector<16x16xf32>
    %c0_24 = arith.constant 0 : index
    %c3_25 = arith.constant 3 : index
    %c0_26 = arith.constant 0 : index
    %c0_27 = arith.constant 0 : index
    %27 = vector.load %arg1[%c0_24, %c3_25, %c0_26, %c0_27] : memref<1x4x16x16xf32, #tpu.memory_space<vmem>>, vector<1x1x16x16xf32>
    %28 = vector.shape_cast %27 : vector<1x1x16x16xf32> to vector<16x16xf32>
    %29 = arith.subf %28, %10 : vector<16x16xf32>
    %30 = math.exp %29 : vector<16x16xf32>
    %31 = arith.addf %26, %30 : vector<16x16xf32>
    %32 = tpu.reciprocal %31 : vector<16x16xf32> -> vector<16x16xf32>
    %c0_28 = arith.constant 0 : index
    %c0_29 = arith.constant 0 : index
    %c0_30 = arith.constant 0 : index
    %33 = vector.load %arg2[%c0_28, %c0_29, %c0_30] : memref<1x16x16xi32, #tpu.memory_space<vmem>>, vector<1x16x16xi32>
    %34 = vector.shape_cast %33 : vector<1x16x16xi32> to vector<16x16xi32>
    %c0_31 = arith.constant 0 : index
    %c0_32 = arith.constant 0 : index
    %c0_33 = arith.constant 0 : index
    %c0_34 = arith.constant 0 : index
    %35 = vector.load %arg1[%c0_31, %c0_32, %c0_33, %c0_34] : memref<1x4x16x16xf32, #tpu.memory_space<vmem>>, vector<1x1x16x16xf32>
    %36 = vector.shape_cast %35 : vector<1x1x16x16xf32> to vector<16x16xf32>
    %37 = arith.subf %36, %10 : vector<16x16xf32>
    %38 = math.exp %37 : vector<16x16xf32>
    %39 = arith.mulf %38, %32 : vector<16x16xf32>
    %c0_i32 = arith.constant 0 : i32
    %40 = vector.broadcast %c0_i32 : i32 to vector<16x16xi32>
    %41 = arith.cmpi eq, %34, %40 : vector<16x16xi32>
    %42 = arith.extui %41 : vector<16x16xi1> to vector<16x16xi32>
    %43 = arith.sitofp %42 : vector<16x16xi32> to vector<16x16xf32>
    %cst_35 = arith.constant 1.000000e+00 : f32
    %44 = vector.broadcast %cst_35 : f32 to vector<16x16xf32>
    %45 = arith.subf %44, %43 : vector<16x16xf32>
    %cst_36 = arith.constant 1.000000e+00 : f32
    %46 = vector.broadcast %cst_36 : f32 to vector<16x16xf32>
    %47 = arith.subf %46, %39 : vector<16x16xf32>
    %cst_37 = arith.constant 0.000000e+00 : f32
    %48 = vector.broadcast %cst_37 : f32 to vector<1x16xf32>
    %49 = tpu.concatenate %48, %45, %48 in 0 : vector<1x16xf32>, vector<16x16xf32>, vector<1x16xf32> -> vector<18x16xf32>
    %50 = vector.extract_strided_slice %49 {offsets = [0, 0], sizes = [16, 16], strides = [1, 1]} : vector<18x16xf32> to vector<16x16xf32>
    %51 = arith.maximumf %45, %50 : vector<16x16xf32>
    %52 = vector.extract_strided_slice %49 {offsets = [2, 0], sizes = [16, 16], strides = [1, 1]} : vector<18x16xf32> to vector<16x16xf32>
    %53 = arith.maximumf %51, %52 : vector<16x16xf32>
    %cst_38 = arith.constant 0.000000e+00 : f32
    %54 = vector.broadcast %cst_38 : f32 to vector<16x1xf32>
    %55 = tpu.concatenate %54, %53, %54 in 1 : vector<16x1xf32>, vector<16x16xf32>, vector<16x1xf32> -> vector<16x18xf32>
    %56 = vector.extract_strided_slice %55 {offsets = [0, 0], sizes = [16, 16], strides = [1, 1]} : vector<16x18xf32> to vector<16x16xf32>
    %57 = arith.maximumf %53, %56 : vector<16x16xf32>
    %58 = vector.extract_strided_slice %55 {offsets = [0, 2], sizes = [16, 16], strides = [1, 1]} : vector<16x18xf32> to vector<16x16xf32>
    %59 = arith.maximumf %57, %58 : vector<16x16xf32>
    %60 = arith.subf %59, %45 : vector<16x16xf32>
    %cst_39 = arith.constant 0.000000e+00 : f32
    %61 = vector.broadcast %cst_39 : f32 to vector<1x16xf32>
    %62 = tpu.concatenate %61, %47, %61 in 0 : vector<1x16xf32>, vector<16x16xf32>, vector<1x16xf32> -> vector<18x16xf32>
    %63 = vector.extract_strided_slice %62 {offsets = [0, 0], sizes = [16, 16], strides = [1, 1]} : vector<18x16xf32> to vector<16x16xf32>
    %64 = arith.maximumf %47, %63 : vector<16x16xf32>
    %65 = vector.extract_strided_slice %62 {offsets = [2, 0], sizes = [16, 16], strides = [1, 1]} : vector<18x16xf32> to vector<16x16xf32>
    %66 = arith.maximumf %64, %65 : vector<16x16xf32>
    %cst_40 = arith.constant 0.000000e+00 : f32
    %67 = vector.broadcast %cst_40 : f32 to vector<16x1xf32>
    %68 = tpu.concatenate %67, %66, %67 in 1 : vector<16x1xf32>, vector<16x16xf32>, vector<16x1xf32> -> vector<16x18xf32>
    %69 = vector.extract_strided_slice %68 {offsets = [0, 0], sizes = [16, 16], strides = [1, 1]} : vector<16x18xf32> to vector<16x16xf32>
    %70 = arith.maximumf %66, %69 : vector<16x16xf32>
    %71 = vector.extract_strided_slice %68 {offsets = [0, 2], sizes = [16, 16], strides = [1, 1]} : vector<16x18xf32> to vector<16x16xf32>
    %72 = arith.maximumf %70, %71 : vector<16x16xf32>
    %73 = arith.subf %72, %47 : vector<16x16xf32>
    %cst_41 = arith.constant 0.000000e+00 : f32
    %74 = vector.broadcast %cst_41 : f32 to vector<2x16xf32>
    %75 = tpu.concatenate %74, %60, %74 in 0 : vector<2x16xf32>, vector<16x16xf32>, vector<2x16xf32> -> vector<20x16xf32>
    %76 = vector.extract_strided_slice %75 {offsets = [0, 0], sizes = [16, 16], strides = [1, 1]} : vector<20x16xf32> to vector<16x16xf32>
    %77 = arith.maximumf %60, %76 : vector<16x16xf32>
    %78 = vector.extract_strided_slice %75 {offsets = [1, 0], sizes = [16, 16], strides = [1, 1]} : vector<20x16xf32> to vector<16x16xf32>
    %79 = arith.maximumf %77, %78 : vector<16x16xf32>
    %80 = vector.extract_strided_slice %75 {offsets = [3, 0], sizes = [16, 16], strides = [1, 1]} : vector<20x16xf32> to vector<16x16xf32>
    %81 = arith.maximumf %79, %80 : vector<16x16xf32>
    %82 = vector.extract_strided_slice %75 {offsets = [4, 0], sizes = [16, 16], strides = [1, 1]} : vector<20x16xf32> to vector<16x16xf32>
    %83 = arith.maximumf %81, %82 : vector<16x16xf32>
    %cst_42 = arith.constant 0.000000e+00 : f32
    %84 = vector.broadcast %cst_42 : f32 to vector<16x2xf32>
    %85 = tpu.concatenate %84, %83, %84 in 1 : vector<16x2xf32>, vector<16x16xf32>, vector<16x2xf32> -> vector<16x20xf32>
    %86 = vector.extract_strided_slice %85 {offsets = [0, 0], sizes = [16, 16], strides = [1, 1]} : vector<16x20xf32> to vector<16x16xf32>
    %87 = arith.maximumf %83, %86 : vector<16x16xf32>
    %88 = vector.extract_strided_slice %85 {offsets = [0, 1], sizes = [16, 16], strides = [1, 1]} : vector<16x20xf32> to vector<16x16xf32>
    %89 = arith.maximumf %87, %88 : vector<16x16xf32>
    %90 = vector.extract_strided_slice %85 {offsets = [0, 3], sizes = [16, 16], strides = [1, 1]} : vector<16x20xf32> to vector<16x16xf32>
    %91 = arith.maximumf %89, %90 : vector<16x16xf32>
    %92 = vector.extract_strided_slice %85 {offsets = [0, 4], sizes = [16, 16], strides = [1, 1]} : vector<16x20xf32> to vector<16x16xf32>
    %93 = arith.maximumf %91, %92 : vector<16x16xf32>
    %cst_43 = arith.constant 0.000000e+00 : f32
    %94 = vector.broadcast %cst_43 : f32 to vector<2x16xf32>
    %95 = tpu.concatenate %94, %73, %94 in 0 : vector<2x16xf32>, vector<16x16xf32>, vector<2x16xf32> -> vector<20x16xf32>
    %96 = vector.extract_strided_slice %95 {offsets = [0, 0], sizes = [16, 16], strides = [1, 1]} : vector<20x16xf32> to vector<16x16xf32>
    %97 = arith.maximumf %73, %96 : vector<16x16xf32>
    %98 = vector.extract_strided_slice %95 {offsets = [1, 0], sizes = [16, 16], strides = [1, 1]} : vector<20x16xf32> to vector<16x16xf32>
    %99 = arith.maximumf %97, %98 : vector<16x16xf32>
    %100 = vector.extract_strided_slice %95 {offsets = [3, 0], sizes = [16, 16], strides = [1, 1]} : vector<20x16xf32> to vector<16x16xf32>
    %101 = arith.maximumf %99, %100 : vector<16x16xf32>
    %102 = vector.extract_strided_slice %95 {offsets = [4, 0], sizes = [16, 16], strides = [1, 1]} : vector<20x16xf32> to vector<16x16xf32>
    %103 = arith.maximumf %101, %102 : vector<16x16xf32>
    %cst_44 = arith.constant 0.000000e+00 : f32
    %104 = vector.broadcast %cst_44 : f32 to vector<16x2xf32>
    %105 = tpu.concatenate %104, %103, %104 in 1 : vector<16x2xf32>, vector<16x16xf32>, vector<16x2xf32> -> vector<16x20xf32>
    %106 = vector.extract_strided_slice %105 {offsets = [0, 0], sizes = [16, 16], strides = [1, 1]} : vector<16x20xf32> to vector<16x16xf32>
    %107 = arith.maximumf %103, %106 : vector<16x16xf32>
    %108 = vector.extract_strided_slice %105 {offsets = [0, 1], sizes = [16, 16], strides = [1, 1]} : vector<16x20xf32> to vector<16x16xf32>
    %109 = arith.maximumf %107, %108 : vector<16x16xf32>
    %110 = vector.extract_strided_slice %105 {offsets = [0, 3], sizes = [16, 16], strides = [1, 1]} : vector<16x20xf32> to vector<16x16xf32>
    %111 = arith.maximumf %109, %110 : vector<16x16xf32>
    %112 = vector.extract_strided_slice %105 {offsets = [0, 4], sizes = [16, 16], strides = [1, 1]} : vector<16x20xf32> to vector<16x16xf32>
    %113 = arith.maximumf %111, %112 : vector<16x16xf32>
    %114 = arith.mulf %73, %93 : vector<16x16xf32>
    %115 = vector.shape_cast %114 : vector<16x16xf32> to vector<1x16x16xf32>
    %cst_45 = arith.constant dense<0.000000e+00> : vector<1xf32>
    %116 = vector.multi_reduction <add>, %115, %cst_45 [1, 2] : vector<1x16x16xf32> to vector<1xf32>
    %117 = vector.shape_cast %116 : vector<1xf32> to vector<1x1x1xf32>
    %118 = vector.extract %117[0, 0, 0] : f32 from vector<1x1x1xf32>
    %119 = vector.shape_cast %73 : vector<16x16xf32> to vector<1x16x16xf32>
    %cst_46 = arith.constant dense<0.000000e+00> : vector<1xf32>
    %120 = vector.multi_reduction <add>, %119, %cst_46 [1, 2] : vector<1x16x16xf32> to vector<1xf32>
    %121 = vector.shape_cast %120 : vector<1xf32> to vector<1x1x1xf32>
    %122 = vector.extract %121[0, 0, 0] : f32 from vector<1x1x1xf32>
    %cst_47 = arith.constant 1.000000e-07 : f32
    %123 = arith.addf %122, %cst_47 : f32
    %124 = arith.divf %118, %123 : f32
    %125 = arith.mulf %113, %60 : vector<16x16xf32>
    %126 = vector.shape_cast %125 : vector<16x16xf32> to vector<1x16x16xf32>
    %cst_48 = arith.constant dense<0.000000e+00> : vector<1xf32>
    %127 = vector.multi_reduction <add>, %126, %cst_48 [1, 2] : vector<1x16x16xf32> to vector<1xf32>
    %128 = vector.shape_cast %127 : vector<1xf32> to vector<1x1x1xf32>
    %129 = vector.extract %128[0, 0, 0] : f32 from vector<1x1x1xf32>
    %130 = vector.shape_cast %60 : vector<16x16xf32> to vector<1x16x16xf32>
    %cst_49 = arith.constant dense<0.000000e+00> : vector<1xf32>
    %131 = vector.multi_reduction <add>, %130, %cst_49 [1, 2] : vector<1x16x16xf32> to vector<1xf32>
    %132 = vector.shape_cast %131 : vector<1xf32> to vector<1x1x1xf32>
    %133 = vector.extract %132[0, 0, 0] : f32 from vector<1x1x1xf32>
    %cst_50 = arith.constant 1.000000e-07 : f32
    %134 = arith.addf %133, %cst_50 : f32
    %135 = arith.divf %129, %134 : f32
    %cst_51 = arith.constant 2.000000e+00 : f32
    %136 = arith.mulf %cst_51, %124 : f32
    %137 = arith.mulf %136, %135 : f32
    %138 = arith.addf %124, %135 : f32
    %cst_52 = arith.constant 1.000000e-07 : f32
    %139 = arith.addf %138, %cst_52 : f32
    %140 = arith.divf %137, %139 : f32
    %cst_53 = arith.constant 0.000000e+00 : f32
    %141 = arith.addf %cst_53, %140 : f32
    %c0_54 = arith.constant 0 : index
    %c1_55 = arith.constant 1 : index
    %c0_56 = arith.constant 0 : index
    %c0_57 = arith.constant 0 : index
    %142 = vector.load %arg1[%c0_54, %c1_55, %c0_56, %c0_57] : memref<1x4x16x16xf32, #tpu.memory_space<vmem>>, vector<1x1x16x16xf32>
    %143 = vector.shape_cast %142 : vector<1x1x16x16xf32> to vector<16x16xf32>
    %144 = arith.subf %143, %10 : vector<16x16xf32>
    %145 = math.exp %144 : vector<16x16xf32>
    %146 = arith.mulf %145, %32 : vector<16x16xf32>
    %c1_i32 = arith.constant 1 : i32
    %147 = vector.broadcast %c1_i32 : i32 to vector<16x16xi32>
    %148 = arith.cmpi eq, %34, %147 : vector<16x16xi32>
    %149 = arith.extui %148 : vector<16x16xi1> to vector<16x16xi32>
    %150 = arith.sitofp %149 : vector<16x16xi32> to vector<16x16xf32>
    %cst_58 = arith.constant 1.000000e+00 : f32
    %151 = vector.broadcast %cst_58 : f32 to vector<16x16xf32>
    %152 = arith.subf %151, %150 : vector<16x16xf32>
    %cst_59 = arith.constant 1.000000e+00 : f32
    %153 = vector.broadcast %cst_59 : f32 to vector<16x16xf32>
    %154 = arith.subf %153, %146 : vector<16x16xf32>
    %cst_60 = arith.constant 0.000000e+00 : f32
    %155 = vector.broadcast %cst_60 : f32 to vector<1x16xf32>
    %156 = tpu.concatenate %155, %152, %155 in 0 : vector<1x16xf32>, vector<16x16xf32>, vector<1x16xf32> -> vector<18x16xf32>
    %157 = vector.extract_strided_slice %156 {offsets = [0, 0], sizes = [16, 16], strides = [1, 1]} : vector<18x16xf32> to vector<16x16xf32>
    %158 = arith.maximumf %152, %157 : vector<16x16xf32>
    %159 = vector.extract_strided_slice %156 {offsets = [2, 0], sizes = [16, 16], strides = [1, 1]} : vector<18x16xf32> to vector<16x16xf32>
    %160 = arith.maximumf %158, %159 : vector<16x16xf32>
    %cst_61 = arith.constant 0.000000e+00 : f32
    %161 = vector.broadcast %cst_61 : f32 to vector<16x1xf32>
    %162 = tpu.concatenate %161, %160, %161 in 1 : vector<16x1xf32>, vector<16x16xf32>, vector<16x1xf32> -> vector<16x18xf32>
    %163 = vector.extract_strided_slice %162 {offsets = [0, 0], sizes = [16, 16], strides = [1, 1]} : vector<16x18xf32> to vector<16x16xf32>
    %164 = arith.maximumf %160, %163 : vector<16x16xf32>
    %165 = vector.extract_strided_slice %162 {offsets = [0, 2], sizes = [16, 16], strides = [1, 1]} : vector<16x18xf32> to vector<16x16xf32>
    %166 = arith.maximumf %164, %165 : vector<16x16xf32>
    %167 = arith.subf %166, %152 : vector<16x16xf32>
    %cst_62 = arith.constant 0.000000e+00 : f32
    %168 = vector.broadcast %cst_62 : f32 to vector<1x16xf32>
    %169 = tpu.concatenate %168, %154, %168 in 0 : vector<1x16xf32>, vector<16x16xf32>, vector<1x16xf32> -> vector<18x16xf32>
    %170 = vector.extract_strided_slice %169 {offsets = [0, 0], sizes = [16, 16], strides = [1, 1]} : vector<18x16xf32> to vector<16x16xf32>
    %171 = arith.maximumf %154, %170 : vector<16x16xf32>
    %172 = vector.extract_strided_slice %169 {offsets = [2, 0], sizes = [16, 16], strides = [1, 1]} : vector<18x16xf32> to vector<16x16xf32>
    %173 = arith.maximumf %171, %172 : vector<16x16xf32>
    %cst_63 = arith.constant 0.000000e+00 : f32
    %174 = vector.broadcast %cst_63 : f32 to vector<16x1xf32>
    %175 = tpu.concatenate %174, %173, %174 in 1 : vector<16x1xf32>, vector<16x16xf32>, vector<16x1xf32> -> vector<16x18xf32>
    %176 = vector.extract_strided_slice %175 {offsets = [0, 0], sizes = [16, 16], strides = [1, 1]} : vector<16x18xf32> to vector<16x16xf32>
    %177 = arith.maximumf %173, %176 : vector<16x16xf32>
    %178 = vector.extract_strided_slice %175 {offsets = [0, 2], sizes = [16, 16], strides = [1, 1]} : vector<16x18xf32> to vector<16x16xf32>
    %179 = arith.maximumf %177, %178 : vector<16x16xf32>
    %180 = arith.subf %179, %154 : vector<16x16xf32>
    %cst_64 = arith.constant 0.000000e+00 : f32
    %181 = vector.broadcast %cst_64 : f32 to vector<2x16xf32>
    %182 = tpu.concatenate %181, %167, %181 in 0 : vector<2x16xf32>, vector<16x16xf32>, vector<2x16xf32> -> vector<20x16xf32>
    %183 = vector.extract_strided_slice %182 {offsets = [0, 0], sizes = [16, 16], strides = [1, 1]} : vector<20x16xf32> to vector<16x16xf32>
    %184 = arith.maximumf %167, %183 : vector<16x16xf32>
    %185 = vector.extract_strided_slice %182 {offsets = [1, 0], sizes = [16, 16], strides = [1, 1]} : vector<20x16xf32> to vector<16x16xf32>
    %186 = arith.maximumf %184, %185 : vector<16x16xf32>
    %187 = vector.extract_strided_slice %182 {offsets = [3, 0], sizes = [16, 16], strides = [1, 1]} : vector<20x16xf32> to vector<16x16xf32>
    %188 = arith.maximumf %186, %187 : vector<16x16xf32>
    %189 = vector.extract_strided_slice %182 {offsets = [4, 0], sizes = [16, 16], strides = [1, 1]} : vector<20x16xf32> to vector<16x16xf32>
    %190 = arith.maximumf %188, %189 : vector<16x16xf32>
    %cst_65 = arith.constant 0.000000e+00 : f32
    %191 = vector.broadcast %cst_65 : f32 to vector<16x2xf32>
    %192 = tpu.concatenate %191, %190, %191 in 1 : vector<16x2xf32>, vector<16x16xf32>, vector<16x2xf32> -> vector<16x20xf32>
    %193 = vector.extract_strided_slice %192 {offsets = [0, 0], sizes = [16, 16], strides = [1, 1]} : vector<16x20xf32> to vector<16x16xf32>
    %194 = arith.maximumf %190, %193 : vector<16x16xf32>
    %195 = vector.extract_strided_slice %192 {offsets = [0, 1], sizes = [16, 16], strides = [1, 1]} : vector<16x20xf32> to vector<16x16xf32>
    %196 = arith.maximumf %194, %195 : vector<16x16xf32>
    %197 = vector.extract_strided_slice %192 {offsets = [0, 3], sizes = [16, 16], strides = [1, 1]} : vector<16x20xf32> to vector<16x16xf32>
    %198 = arith.maximumf %196, %197 : vector<16x16xf32>
    %199 = vector.extract_strided_slice %192 {offsets = [0, 4], sizes = [16, 16], strides = [1, 1]} : vector<16x20xf32> to vector<16x16xf32>
    %200 = arith.maximumf %198, %199 : vector<16x16xf32>
    %cst_66 = arith.constant 0.000000e+00 : f32
    %201 = vector.broadcast %cst_66 : f32 to vector<2x16xf32>
    %202 = tpu.concatenate %201, %180, %201 in 0 : vector<2x16xf32>, vector<16x16xf32>, vector<2x16xf32> -> vector<20x16xf32>
    %203 = vector.extract_strided_slice %202 {offsets = [0, 0], sizes = [16, 16], strides = [1, 1]} : vector<20x16xf32> to vector<16x16xf32>
    %204 = arith.maximumf %180, %203 : vector<16x16xf32>
    %205 = vector.extract_strided_slice %202 {offsets = [1, 0], sizes = [16, 16], strides = [1, 1]} : vector<20x16xf32> to vector<16x16xf32>
    %206 = arith.maximumf %204, %205 : vector<16x16xf32>
    %207 = vector.extract_strided_slice %202 {offsets = [3, 0], sizes = [16, 16], strides = [1, 1]} : vector<20x16xf32> to vector<16x16xf32>
    %208 = arith.maximumf %206, %207 : vector<16x16xf32>
    %209 = vector.extract_strided_slice %202 {offsets = [4, 0], sizes = [16, 16], strides = [1, 1]} : vector<20x16xf32> to vector<16x16xf32>
    %210 = arith.maximumf %208, %209 : vector<16x16xf32>
    %cst_67 = arith.constant 0.000000e+00 : f32
    %211 = vector.broadcast %cst_67 : f32 to vector<16x2xf32>
    %212 = tpu.concatenate %211, %210, %211 in 1 : vector<16x2xf32>, vector<16x16xf32>, vector<16x2xf32> -> vector<16x20xf32>
    %213 = vector.extract_strided_slice %212 {offsets = [0, 0], sizes = [16, 16], strides = [1, 1]} : vector<16x20xf32> to vector<16x16xf32>
    %214 = arith.maximumf %210, %213 : vector<16x16xf32>
    %215 = vector.extract_strided_slice %212 {offsets = [0, 1], sizes = [16, 16], strides = [1, 1]} : vector<16x20xf32> to vector<16x16xf32>
    %216 = arith.maximumf %214, %215 : vector<16x16xf32>
    %217 = vector.extract_strided_slice %212 {offsets = [0, 3], sizes = [16, 16], strides = [1, 1]} : vector<16x20xf32> to vector<16x16xf32>
    %218 = arith.maximumf %216, %217 : vector<16x16xf32>
    %219 = vector.extract_strided_slice %212 {offsets = [0, 4], sizes = [16, 16], strides = [1, 1]} : vector<16x20xf32> to vector<16x16xf32>
    %220 = arith.maximumf %218, %219 : vector<16x16xf32>
    %221 = arith.mulf %180, %200 : vector<16x16xf32>
    %222 = vector.shape_cast %221 : vector<16x16xf32> to vector<1x16x16xf32>
    %cst_68 = arith.constant dense<0.000000e+00> : vector<1xf32>
    %223 = vector.multi_reduction <add>, %222, %cst_68 [1, 2] : vector<1x16x16xf32> to vector<1xf32>
    %224 = vector.shape_cast %223 : vector<1xf32> to vector<1x1x1xf32>
    %225 = vector.extract %224[0, 0, 0] : f32 from vector<1x1x1xf32>
    %226 = vector.shape_cast %180 : vector<16x16xf32> to vector<1x16x16xf32>
    %cst_69 = arith.constant dense<0.000000e+00> : vector<1xf32>
    %227 = vector.multi_reduction <add>, %226, %cst_69 [1, 2] : vector<1x16x16xf32> to vector<1xf32>
    %228 = vector.shape_cast %227 : vector<1xf32> to vector<1x1x1xf32>
    %229 = vector.extract %228[0, 0, 0] : f32 from vector<1x1x1xf32>
    %cst_70 = arith.constant 1.000000e-07 : f32
    %230 = arith.addf %229, %cst_70 : f32
    %231 = arith.divf %225, %230 : f32
    %232 = arith.mulf %220, %167 : vector<16x16xf32>
    %233 = vector.shape_cast %232 : vector<16x16xf32> to vector<1x16x16xf32>
    %cst_71 = arith.constant dense<0.000000e+00> : vector<1xf32>
    %234 = vector.multi_reduction <add>, %233, %cst_71 [1, 2] : vector<1x16x16xf32> to vector<1xf32>
    %235 = vector.shape_cast %234 : vector<1xf32> to vector<1x1x1xf32>
    %236 = vector.extract %235[0, 0, 0] : f32 from vector<1x1x1xf32>
    %237 = vector.shape_cast %167 : vector<16x16xf32> to vector<1x16x16xf32>
    %cst_72 = arith.constant dense<0.000000e+00> : vector<1xf32>
    %238 = vector.multi_reduction <add>, %237, %cst_72 [1, 2] : vector<1x16x16xf32> to vector<1xf32>
    %239 = vector.shape_cast %238 : vector<1xf32> to vector<1x1x1xf32>
    %240 = vector.extract %239[0, 0, 0] : f32 from vector<1x1x1xf32>
    %cst_73 = arith.constant 1.000000e-07 : f32
    %241 = arith.addf %240, %cst_73 : f32
    %242 = arith.divf %236, %241 : f32
    %cst_74 = arith.constant 2.000000e+00 : f32
    %243 = arith.mulf %cst_74, %231 : f32
    %244 = arith.mulf %243, %242 : f32
    %245 = arith.addf %231, %242 : f32
    %cst_75 = arith.constant 1.000000e-07 : f32
    %246 = arith.addf %245, %cst_75 : f32
    %247 = arith.divf %244, %246 : f32
    %248 = arith.addf %141, %247 : f32
    %c0_76 = arith.constant 0 : index
    %c2_77 = arith.constant 2 : index
    %c0_78 = arith.constant 0 : index
    %c0_79 = arith.constant 0 : index
    %249 = vector.load %arg1[%c0_76, %c2_77, %c0_78, %c0_79] : memref<1x4x16x16xf32, #tpu.memory_space<vmem>>, vector<1x1x16x16xf32>
    %250 = vector.shape_cast %249 : vector<1x1x16x16xf32> to vector<16x16xf32>
    %251 = arith.subf %250, %10 : vector<16x16xf32>
    %252 = math.exp %251 : vector<16x16xf32>
    %253 = arith.mulf %252, %32 : vector<16x16xf32>
    %c2_i32 = arith.constant 2 : i32
    %254 = vector.broadcast %c2_i32 : i32 to vector<16x16xi32>
    %255 = arith.cmpi eq, %34, %254 : vector<16x16xi32>
    %256 = arith.extui %255 : vector<16x16xi1> to vector<16x16xi32>
    %257 = arith.sitofp %256 : vector<16x16xi32> to vector<16x16xf32>
    %cst_80 = arith.constant 1.000000e+00 : f32
    %258 = vector.broadcast %cst_80 : f32 to vector<16x16xf32>
    %259 = arith.subf %258, %257 : vector<16x16xf32>
    %cst_81 = arith.constant 1.000000e+00 : f32
    %260 = vector.broadcast %cst_81 : f32 to vector<16x16xf32>
    %261 = arith.subf %260, %253 : vector<16x16xf32>
    %cst_82 = arith.constant 0.000000e+00 : f32
    %262 = vector.broadcast %cst_82 : f32 to vector<1x16xf32>
    %263 = tpu.concatenate %262, %259, %262 in 0 : vector<1x16xf32>, vector<16x16xf32>, vector<1x16xf32> -> vector<18x16xf32>
    %264 = vector.extract_strided_slice %263 {offsets = [0, 0], sizes = [16, 16], strides = [1, 1]} : vector<18x16xf32> to vector<16x16xf32>
    %265 = arith.maximumf %259, %264 : vector<16x16xf32>
    %266 = vector.extract_strided_slice %263 {offsets = [2, 0], sizes = [16, 16], strides = [1, 1]} : vector<18x16xf32> to vector<16x16xf32>
    %267 = arith.maximumf %265, %266 : vector<16x16xf32>
    %cst_83 = arith.constant 0.000000e+00 : f32
    %268 = vector.broadcast %cst_83 : f32 to vector<16x1xf32>
    %269 = tpu.concatenate %268, %267, %268 in 1 : vector<16x1xf32>, vector<16x16xf32>, vector<16x1xf32> -> vector<16x18xf32>
    %270 = vector.extract_strided_slice %269 {offsets = [0, 0], sizes = [16, 16], strides = [1, 1]} : vector<16x18xf32> to vector<16x16xf32>
    %271 = arith.maximumf %267, %270 : vector<16x16xf32>
    %272 = vector.extract_strided_slice %269 {offsets = [0, 2], sizes = [16, 16], strides = [1, 1]} : vector<16x18xf32> to vector<16x16xf32>
    %273 = arith.maximumf %271, %272 : vector<16x16xf32>
    %274 = arith.subf %273, %259 : vector<16x16xf32>
    %cst_84 = arith.constant 0.000000e+00 : f32
    %275 = vector.broadcast %cst_84 : f32 to vector<1x16xf32>
    %276 = tpu.concatenate %275, %261, %275 in 0 : vector<1x16xf32>, vector<16x16xf32>, vector<1x16xf32> -> vector<18x16xf32>
    %277 = vector.extract_strided_slice %276 {offsets = [0, 0], sizes = [16, 16], strides = [1, 1]} : vector<18x16xf32> to vector<16x16xf32>
    %278 = arith.maximumf %261, %277 : vector<16x16xf32>
    %279 = vector.extract_strided_slice %276 {offsets = [2, 0], sizes = [16, 16], strides = [1, 1]} : vector<18x16xf32> to vector<16x16xf32>
    %280 = arith.maximumf %278, %279 : vector<16x16xf32>
    %cst_85 = arith.constant 0.000000e+00 : f32
    %281 = vector.broadcast %cst_85 : f32 to vector<16x1xf32>
    %282 = tpu.concatenate %281, %280, %281 in 1 : vector<16x1xf32>, vector<16x16xf32>, vector<16x1xf32> -> vector<16x18xf32>
    %283 = vector.extract_strided_slice %282 {offsets = [0, 0], sizes = [16, 16], strides = [1, 1]} : vector<16x18xf32> to vector<16x16xf32>
    %284 = arith.maximumf %280, %283 : vector<16x16xf32>
    %285 = vector.extract_strided_slice %282 {offsets = [0, 2], sizes = [16, 16], strides = [1, 1]} : vector<16x18xf32> to vector<16x16xf32>
    %286 = arith.maximumf %284, %285 : vector<16x16xf32>
    %287 = arith.subf %286, %261 : vector<16x16xf32>
    %cst_86 = arith.constant 0.000000e+00 : f32
    %288 = vector.broadcast %cst_86 : f32 to vector<2x16xf32>
    %289 = tpu.concatenate %288, %274, %288 in 0 : vector<2x16xf32>, vector<16x16xf32>, vector<2x16xf32> -> vector<20x16xf32>
    %290 = vector.extract_strided_slice %289 {offsets = [0, 0], sizes = [16, 16], strides = [1, 1]} : vector<20x16xf32> to vector<16x16xf32>
    %291 = arith.maximumf %274, %290 : vector<16x16xf32>
    %292 = vector.extract_strided_slice %289 {offsets = [1, 0], sizes = [16, 16], strides = [1, 1]} : vector<20x16xf32> to vector<16x16xf32>
    %293 = arith.maximumf %291, %292 : vector<16x16xf32>
    %294 = vector.extract_strided_slice %289 {offsets = [3, 0], sizes = [16, 16], strides = [1, 1]} : vector<20x16xf32> to vector<16x16xf32>
    %295 = arith.maximumf %293, %294 : vector<16x16xf32>
    %296 = vector.extract_strided_slice %289 {offsets = [4, 0], sizes = [16, 16], strides = [1, 1]} : vector<20x16xf32> to vector<16x16xf32>
    %297 = arith.maximumf %295, %296 : vector<16x16xf32>
    %cst_87 = arith.constant 0.000000e+00 : f32
    %298 = vector.broadcast %cst_87 : f32 to vector<16x2xf32>
    %299 = tpu.concatenate %298, %297, %298 in 1 : vector<16x2xf32>, vector<16x16xf32>, vector<16x2xf32> -> vector<16x20xf32>
    %300 = vector.extract_strided_slice %299 {offsets = [0, 0], sizes = [16, 16], strides = [1, 1]} : vector<16x20xf32> to vector<16x16xf32>
    %301 = arith.maximumf %297, %300 : vector<16x16xf32>
    %302 = vector.extract_strided_slice %299 {offsets = [0, 1], sizes = [16, 16], strides = [1, 1]} : vector<16x20xf32> to vector<16x16xf32>
    %303 = arith.maximumf %301, %302 : vector<16x16xf32>
    %304 = vector.extract_strided_slice %299 {offsets = [0, 3], sizes = [16, 16], strides = [1, 1]} : vector<16x20xf32> to vector<16x16xf32>
    %305 = arith.maximumf %303, %304 : vector<16x16xf32>
    %306 = vector.extract_strided_slice %299 {offsets = [0, 4], sizes = [16, 16], strides = [1, 1]} : vector<16x20xf32> to vector<16x16xf32>
    %307 = arith.maximumf %305, %306 : vector<16x16xf32>
    %cst_88 = arith.constant 0.000000e+00 : f32
    %308 = vector.broadcast %cst_88 : f32 to vector<2x16xf32>
    %309 = tpu.concatenate %308, %287, %308 in 0 : vector<2x16xf32>, vector<16x16xf32>, vector<2x16xf32> -> vector<20x16xf32>
    %310 = vector.extract_strided_slice %309 {offsets = [0, 0], sizes = [16, 16], strides = [1, 1]} : vector<20x16xf32> to vector<16x16xf32>
    %311 = arith.maximumf %287, %310 : vector<16x16xf32>
    %312 = vector.extract_strided_slice %309 {offsets = [1, 0], sizes = [16, 16], strides = [1, 1]} : vector<20x16xf32> to vector<16x16xf32>
    %313 = arith.maximumf %311, %312 : vector<16x16xf32>
    %314 = vector.extract_strided_slice %309 {offsets = [3, 0], sizes = [16, 16], strides = [1, 1]} : vector<20x16xf32> to vector<16x16xf32>
    %315 = arith.maximumf %313, %314 : vector<16x16xf32>
    %316 = vector.extract_strided_slice %309 {offsets = [4, 0], sizes = [16, 16], strides = [1, 1]} : vector<20x16xf32> to vector<16x16xf32>
    %317 = arith.maximumf %315, %316 : vector<16x16xf32>
    %cst_89 = arith.constant 0.000000e+00 : f32
    %318 = vector.broadcast %cst_89 : f32 to vector<16x2xf32>
    %319 = tpu.concatenate %318, %317, %318 in 1 : vector<16x2xf32>, vector<16x16xf32>, vector<16x2xf32> -> vector<16x20xf32>
    %320 = vector.extract_strided_slice %319 {offsets = [0, 0], sizes = [16, 16], strides = [1, 1]} : vector<16x20xf32> to vector<16x16xf32>
    %321 = arith.maximumf %317, %320 : vector<16x16xf32>
    %322 = vector.extract_strided_slice %319 {offsets = [0, 1], sizes = [16, 16], strides = [1, 1]} : vector<16x20xf32> to vector<16x16xf32>
    %323 = arith.maximumf %321, %322 : vector<16x16xf32>
    %324 = vector.extract_strided_slice %319 {offsets = [0, 3], sizes = [16, 16], strides = [1, 1]} : vector<16x20xf32> to vector<16x16xf32>
    %325 = arith.maximumf %323, %324 : vector<16x16xf32>
    %326 = vector.extract_strided_slice %319 {offsets = [0, 4], sizes = [16, 16], strides = [1, 1]} : vector<16x20xf32> to vector<16x16xf32>
    %327 = arith.maximumf %325, %326 : vector<16x16xf32>
    %328 = arith.mulf %287, %307 : vector<16x16xf32>
    %329 = vector.shape_cast %328 : vector<16x16xf32> to vector<1x16x16xf32>
    %cst_90 = arith.constant dense<0.000000e+00> : vector<1xf32>
    %330 = vector.multi_reduction <add>, %329, %cst_90 [1, 2] : vector<1x16x16xf32> to vector<1xf32>
    %331 = vector.shape_cast %330 : vector<1xf32> to vector<1x1x1xf32>
    %332 = vector.extract %331[0, 0, 0] : f32 from vector<1x1x1xf32>
    %333 = vector.shape_cast %287 : vector<16x16xf32> to vector<1x16x16xf32>
    %cst_91 = arith.constant dense<0.000000e+00> : vector<1xf32>
    %334 = vector.multi_reduction <add>, %333, %cst_91 [1, 2] : vector<1x16x16xf32> to vector<1xf32>
    %335 = vector.shape_cast %334 : vector<1xf32> to vector<1x1x1xf32>
    %336 = vector.extract %335[0, 0, 0] : f32 from vector<1x1x1xf32>
    %cst_92 = arith.constant 1.000000e-07 : f32
    %337 = arith.addf %336, %cst_92 : f32
    %338 = arith.divf %332, %337 : f32
    %339 = arith.mulf %327, %274 : vector<16x16xf32>
    %340 = vector.shape_cast %339 : vector<16x16xf32> to vector<1x16x16xf32>
    %cst_93 = arith.constant dense<0.000000e+00> : vector<1xf32>
    %341 = vector.multi_reduction <add>, %340, %cst_93 [1, 2] : vector<1x16x16xf32> to vector<1xf32>
    %342 = vector.shape_cast %341 : vector<1xf32> to vector<1x1x1xf32>
    %343 = vector.extract %342[0, 0, 0] : f32 from vector<1x1x1xf32>
    %344 = vector.shape_cast %274 : vector<16x16xf32> to vector<1x16x16xf32>
    %cst_94 = arith.constant dense<0.000000e+00> : vector<1xf32>
    %345 = vector.multi_reduction <add>, %344, %cst_94 [1, 2] : vector<1x16x16xf32> to vector<1xf32>
    %346 = vector.shape_cast %345 : vector<1xf32> to vector<1x1x1xf32>
    %347 = vector.extract %346[0, 0, 0] : f32 from vector<1x1x1xf32>
    %cst_95 = arith.constant 1.000000e-07 : f32
    %348 = arith.addf %347, %cst_95 : f32
    %349 = arith.divf %343, %348 : f32
    %cst_96 = arith.constant 2.000000e+00 : f32
    %350 = arith.mulf %cst_96, %338 : f32
    %351 = arith.mulf %350, %349 : f32
    %352 = arith.addf %338, %349 : f32
    %cst_97 = arith.constant 1.000000e-07 : f32
    %353 = arith.addf %352, %cst_97 : f32
    %354 = arith.divf %351, %353 : f32
    %355 = arith.addf %248, %354 : f32
    %c0_98 = arith.constant 0 : index
    %c3_99 = arith.constant 3 : index
    %c0_100 = arith.constant 0 : index
    %c0_101 = arith.constant 0 : index
    %356 = vector.load %arg1[%c0_98, %c3_99, %c0_100, %c0_101] : memref<1x4x16x16xf32, #tpu.memory_space<vmem>>, vector<1x1x16x16xf32>
    %357 = vector.shape_cast %356 : vector<1x1x16x16xf32> to vector<16x16xf32>
    %358 = arith.subf %357, %10 : vector<16x16xf32>
    %359 = math.exp %358 : vector<16x16xf32>
    %360 = arith.mulf %359, %32 : vector<16x16xf32>
    %c3_i32 = arith.constant 3 : i32
    %361 = vector.broadcast %c3_i32 : i32 to vector<16x16xi32>
    %362 = arith.cmpi eq, %34, %361 : vector<16x16xi32>
    %363 = arith.extui %362 : vector<16x16xi1> to vector<16x16xi32>
    %364 = arith.sitofp %363 : vector<16x16xi32> to vector<16x16xf32>
    %cst_102 = arith.constant 1.000000e+00 : f32
    %365 = vector.broadcast %cst_102 : f32 to vector<16x16xf32>
    %366 = arith.subf %365, %364 : vector<16x16xf32>
    %cst_103 = arith.constant 1.000000e+00 : f32
    %367 = vector.broadcast %cst_103 : f32 to vector<16x16xf32>
    %368 = arith.subf %367, %360 : vector<16x16xf32>
    %cst_104 = arith.constant 0.000000e+00 : f32
    %369 = vector.broadcast %cst_104 : f32 to vector<1x16xf32>
    %370 = tpu.concatenate %369, %366, %369 in 0 : vector<1x16xf32>, vector<16x16xf32>, vector<1x16xf32> -> vector<18x16xf32>
    %371 = vector.extract_strided_slice %370 {offsets = [0, 0], sizes = [16, 16], strides = [1, 1]} : vector<18x16xf32> to vector<16x16xf32>
    %372 = arith.maximumf %366, %371 : vector<16x16xf32>
    %373 = vector.extract_strided_slice %370 {offsets = [2, 0], sizes = [16, 16], strides = [1, 1]} : vector<18x16xf32> to vector<16x16xf32>
    %374 = arith.maximumf %372, %373 : vector<16x16xf32>
    %cst_105 = arith.constant 0.000000e+00 : f32
    %375 = vector.broadcast %cst_105 : f32 to vector<16x1xf32>
    %376 = tpu.concatenate %375, %374, %375 in 1 : vector<16x1xf32>, vector<16x16xf32>, vector<16x1xf32> -> vector<16x18xf32>
    %377 = vector.extract_strided_slice %376 {offsets = [0, 0], sizes = [16, 16], strides = [1, 1]} : vector<16x18xf32> to vector<16x16xf32>
    %378 = arith.maximumf %374, %377 : vector<16x16xf32>
    %379 = vector.extract_strided_slice %376 {offsets = [0, 2], sizes = [16, 16], strides = [1, 1]} : vector<16x18xf32> to vector<16x16xf32>
    %380 = arith.maximumf %378, %379 : vector<16x16xf32>
    %381 = arith.subf %380, %366 : vector<16x16xf32>
    %cst_106 = arith.constant 0.000000e+00 : f32
    %382 = vector.broadcast %cst_106 : f32 to vector<1x16xf32>
    %383 = tpu.concatenate %382, %368, %382 in 0 : vector<1x16xf32>, vector<16x16xf32>, vector<1x16xf32> -> vector<18x16xf32>
    %384 = vector.extract_strided_slice %383 {offsets = [0, 0], sizes = [16, 16], strides = [1, 1]} : vector<18x16xf32> to vector<16x16xf32>
    %385 = arith.maximumf %368, %384 : vector<16x16xf32>
    %386 = vector.extract_strided_slice %383 {offsets = [2, 0], sizes = [16, 16], strides = [1, 1]} : vector<18x16xf32> to vector<16x16xf32>
    %387 = arith.maximumf %385, %386 : vector<16x16xf32>
    %cst_107 = arith.constant 0.000000e+00 : f32
    %388 = vector.broadcast %cst_107 : f32 to vector<16x1xf32>
    %389 = tpu.concatenate %388, %387, %388 in 1 : vector<16x1xf32>, vector<16x16xf32>, vector<16x1xf32> -> vector<16x18xf32>
    %390 = vector.extract_strided_slice %389 {offsets = [0, 0], sizes = [16, 16], strides = [1, 1]} : vector<16x18xf32> to vector<16x16xf32>
    %391 = arith.maximumf %387, %390 : vector<16x16xf32>
    %392 = vector.extract_strided_slice %389 {offsets = [0, 2], sizes = [16, 16], strides = [1, 1]} : vector<16x18xf32> to vector<16x16xf32>
    %393 = arith.maximumf %391, %392 : vector<16x16xf32>
    %394 = arith.subf %393, %368 : vector<16x16xf32>
    %cst_108 = arith.constant 0.000000e+00 : f32
    %395 = vector.broadcast %cst_108 : f32 to vector<2x16xf32>
    %396 = tpu.concatenate %395, %381, %395 in 0 : vector<2x16xf32>, vector<16x16xf32>, vector<2x16xf32> -> vector<20x16xf32>
    %397 = vector.extract_strided_slice %396 {offsets = [0, 0], sizes = [16, 16], strides = [1, 1]} : vector<20x16xf32> to vector<16x16xf32>
    %398 = arith.maximumf %381, %397 : vector<16x16xf32>
    %399 = vector.extract_strided_slice %396 {offsets = [1, 0], sizes = [16, 16], strides = [1, 1]} : vector<20x16xf32> to vector<16x16xf32>
    %400 = arith.maximumf %398, %399 : vector<16x16xf32>
    %401 = vector.extract_strided_slice %396 {offsets = [3, 0], sizes = [16, 16], strides = [1, 1]} : vector<20x16xf32> to vector<16x16xf32>
    %402 = arith.maximumf %400, %401 : vector<16x16xf32>
    %403 = vector.extract_strided_slice %396 {offsets = [4, 0], sizes = [16, 16], strides = [1, 1]} : vector<20x16xf32> to vector<16x16xf32>
    %404 = arith.maximumf %402, %403 : vector<16x16xf32>
    %cst_109 = arith.constant 0.000000e+00 : f32
    %405 = vector.broadcast %cst_109 : f32 to vector<16x2xf32>
    %406 = tpu.concatenate %405, %404, %405 in 1 : vector<16x2xf32>, vector<16x16xf32>, vector<16x2xf32> -> vector<16x20xf32>
    %407 = vector.extract_strided_slice %406 {offsets = [0, 0], sizes = [16, 16], strides = [1, 1]} : vector<16x20xf32> to vector<16x16xf32>
    %408 = arith.maximumf %404, %407 : vector<16x16xf32>
    %409 = vector.extract_strided_slice %406 {offsets = [0, 1], sizes = [16, 16], strides = [1, 1]} : vector<16x20xf32> to vector<16x16xf32>
    %410 = arith.maximumf %408, %409 : vector<16x16xf32>
    %411 = vector.extract_strided_slice %406 {offsets = [0, 3], sizes = [16, 16], strides = [1, 1]} : vector<16x20xf32> to vector<16x16xf32>
    %412 = arith.maximumf %410, %411 : vector<16x16xf32>
    %413 = vector.extract_strided_slice %406 {offsets = [0, 4], sizes = [16, 16], strides = [1, 1]} : vector<16x20xf32> to vector<16x16xf32>
    %414 = arith.maximumf %412, %413 : vector<16x16xf32>
    %cst_110 = arith.constant 0.000000e+00 : f32
    %415 = vector.broadcast %cst_110 : f32 to vector<2x16xf32>
    %416 = tpu.concatenate %415, %394, %415 in 0 : vector<2x16xf32>, vector<16x16xf32>, vector<2x16xf32> -> vector<20x16xf32>
    %417 = vector.extract_strided_slice %416 {offsets = [0, 0], sizes = [16, 16], strides = [1, 1]} : vector<20x16xf32> to vector<16x16xf32>
    %418 = arith.maximumf %394, %417 : vector<16x16xf32>
    %419 = vector.extract_strided_slice %416 {offsets = [1, 0], sizes = [16, 16], strides = [1, 1]} : vector<20x16xf32> to vector<16x16xf32>
    %420 = arith.maximumf %418, %419 : vector<16x16xf32>
    %421 = vector.extract_strided_slice %416 {offsets = [3, 0], sizes = [16, 16], strides = [1, 1]} : vector<20x16xf32> to vector<16x16xf32>
    %422 = arith.maximumf %420, %421 : vector<16x16xf32>
    %423 = vector.extract_strided_slice %416 {offsets = [4, 0], sizes = [16, 16], strides = [1, 1]} : vector<20x16xf32> to vector<16x16xf32>
    %424 = arith.maximumf %422, %423 : vector<16x16xf32>
    %cst_111 = arith.constant 0.000000e+00 : f32
    %425 = vector.broadcast %cst_111 : f32 to vector<16x2xf32>
    %426 = tpu.concatenate %425, %424, %425 in 1 : vector<16x2xf32>, vector<16x16xf32>, vector<16x2xf32> -> vector<16x20xf32>
    %427 = vector.extract_strided_slice %426 {offsets = [0, 0], sizes = [16, 16], strides = [1, 1]} : vector<16x20xf32> to vector<16x16xf32>
    %428 = arith.maximumf %424, %427 : vector<16x16xf32>
    %429 = vector.extract_strided_slice %426 {offsets = [0, 1], sizes = [16, 16], strides = [1, 1]} : vector<16x20xf32> to vector<16x16xf32>
    %430 = arith.maximumf %428, %429 : vector<16x16xf32>
    %431 = vector.extract_strided_slice %426 {offsets = [0, 3], sizes = [16, 16], strides = [1, 1]} : vector<16x20xf32> to vector<16x16xf32>
    %432 = arith.maximumf %430, %431 : vector<16x16xf32>
    %433 = vector.extract_strided_slice %426 {offsets = [0, 4], sizes = [16, 16], strides = [1, 1]} : vector<16x20xf32> to vector<16x16xf32>
    %434 = arith.maximumf %432, %433 : vector<16x16xf32>
    %435 = arith.mulf %394, %414 : vector<16x16xf32>
    %436 = vector.shape_cast %435 : vector<16x16xf32> to vector<1x16x16xf32>
    %cst_112 = arith.constant dense<0.000000e+00> : vector<1xf32>
    %437 = vector.multi_reduction <add>, %436, %cst_112 [1, 2] : vector<1x16x16xf32> to vector<1xf32>
    %438 = vector.shape_cast %437 : vector<1xf32> to vector<1x1x1xf32>
    %439 = vector.extract %438[0, 0, 0] : f32 from vector<1x1x1xf32>
    %440 = vector.shape_cast %394 : vector<16x16xf32> to vector<1x16x16xf32>
    %cst_113 = arith.constant dense<0.000000e+00> : vector<1xf32>
    %441 = vector.multi_reduction <add>, %440, %cst_113 [1, 2] : vector<1x16x16xf32> to vector<1xf32>
    %442 = vector.shape_cast %441 : vector<1xf32> to vector<1x1x1xf32>
    %443 = vector.extract %442[0, 0, 0] : f32 from vector<1x1x1xf32>
    %cst_114 = arith.constant 1.000000e-07 : f32
    %444 = arith.addf %443, %cst_114 : f32
    %445 = arith.divf %439, %444 : f32
    %446 = arith.mulf %434, %381 : vector<16x16xf32>
    %447 = vector.shape_cast %446 : vector<16x16xf32> to vector<1x16x16xf32>
    %cst_115 = arith.constant dense<0.000000e+00> : vector<1xf32>
    %448 = vector.multi_reduction <add>, %447, %cst_115 [1, 2] : vector<1x16x16xf32> to vector<1xf32>
    %449 = vector.shape_cast %448 : vector<1xf32> to vector<1x1x1xf32>
    %450 = vector.extract %449[0, 0, 0] : f32 from vector<1x1x1xf32>
    %451 = vector.shape_cast %381 : vector<16x16xf32> to vector<1x16x16xf32>
    %cst_116 = arith.constant dense<0.000000e+00> : vector<1xf32>
    %452 = vector.multi_reduction <add>, %451, %cst_116 [1, 2] : vector<1x16x16xf32> to vector<1xf32>
    %453 = vector.shape_cast %452 : vector<1xf32> to vector<1x1x1xf32>
    %454 = vector.extract %453[0, 0, 0] : f32 from vector<1x1x1xf32>
    %cst_117 = arith.constant 1.000000e-07 : f32
    %455 = arith.addf %454, %cst_117 : f32
    %456 = arith.divf %450, %455 : f32
    %cst_118 = arith.constant 2.000000e+00 : f32
    %457 = arith.mulf %cst_118, %445 : f32
    %458 = arith.mulf %457, %456 : f32
    %459 = arith.addf %445, %456 : f32
    %cst_119 = arith.constant 1.000000e-07 : f32
    %460 = arith.addf %459, %cst_119 : f32
    %461 = arith.divf %458, %460 : f32
    %462 = arith.addf %355, %461 : f32
    %463 = vector.broadcast %462 : f32 to vector<1x8x128xf32>
    %c0_120 = arith.constant 0 : index
    %c0_121 = arith.constant 0 : index
    %c0_122 = arith.constant 0 : index
    %464 = vector.load %arg3[%c0_120, %c0_121, %c0_122] : memref<1x8x128xf32, #tpu.memory_space<vmem>>, vector<1x8x128xf32>
    tpu.vector_store %arg3[%c0_120, %c0_121, %c0_122], %463 {strides = array<i32>} : memref<1x8x128xf32, #tpu.memory_space<vmem>>, vector<1x8x128xf32>,
    return
  }
  func.func @transform_0(%arg0: i32) -> (i32, i32, i32, i32) {
    %c0_i32 = arith.constant 0 : i32
    %c0_i32_0 = arith.constant 0 : i32
    %c0_i32_1 = arith.constant 0 : i32
    %c0_i32_2 = arith.constant 0 : i32
    return %arg0, %c0_i32, %c0_i32_0, %c0_i32_1 : i32, i32, i32, i32
  }
  func.func @transform_1(%arg0: i32) -> (i32, i32, i32) {
    %c0_i32 = arith.constant 0 : i32
    %c0_i32_0 = arith.constant 0 : i32
    %c0_i32_1 = arith.constant 0 : i32
    return %arg0, %c0_i32, %c0_i32_0 : i32, i32, i32
  }
  func.func @transform_2(%arg0: i32) -> (i32, i32, i32) {
    %c0_i32 = arith.constant 0 : i32
    %c0_i32_0 = arith.constant 0 : i32
    %c0_i32_1 = arith.constant 0 : i32
    return %arg0, %c0_i32, %c0_i32_0 : i32, i32, i32
  }
}

</mosaic_0001>

<llo_original>
// kernel: tpu_custom_call.1
$region0: #{tpu_custom_call.1}
  #allocation0 [shape = 'u32[]', space=smem, size = 0x4, offset = 0x4, fixed_abs, tag = 'smem constant byte address 0x4 - core index']
  #allocation1 [shape = 'u32[144,128]{1,0:T(1,128)}', space=vmem, size = 0x12000, scoped, tag = 'internal scratch']
  %s0 = inlined_call_operand.hbm [shape: f32[2,4,16,16], index: 0, kind: input, shape index: {}]
  %s1 = inlined_call_operand.hbm [shape: s32[2,16,16], index: 1, kind: input, shape index: {}]
  %s2 = inlined_call_operand.hbm [shape: f32[2,8,128], index: 2, kind: output, shape index: {}]
  %s3 = sld [smem:[#allocation0]]
  $region49: #{tpu_custom_call.1} parent=0
    _
  %s5 = ssub.s32 1, %s3
  %s6 = scalar_select 0, %s5, %s3
  $region1: #{tpu_custom_call.1} parent=0
    #allocation2 [shape = 'u8[65536]{0}', space=vmem, size = 0x10000, scoped, tag = 'input window, operand 0']
    #allocation3 [shape = 's32[2]{0}', space=sflag, size = 0x8, scoped, tag = 'scoped memory for tpu_custom_call.1']
    #allocation4 [shape = 's32[2]{0}', space=sflag, size = 0x8, scoped, tag = 'scoped memory for tpu_custom_call.1']
    #allocation5 [shape = 'u8[16384]{0}', space=vmem, size = 0x4000, scoped, tag = 'input window, operand 1']
    #allocation6 [shape = 's32[2]{0}', space=sflag, size = 0x8, scoped, tag = 'scoped memory for tpu_custom_call.1']
    #allocation7 [shape = 'u8[8192]{0}', space=vmem, size = 0x2000, scoped, tag = 'output window, operand 0']
    %7 = vsyncpa [#allocation3], 0
    %s8 = scalar_lea.sflag [#allocation3], 1
    %9 = vsyncpa %s8, 0
    %10 = vsyncpa [#allocation6], 0
    %s11 = scalar_lea.sflag [#allocation6], 1
    %12 = vsyncpa %s11, 0
    %13 = vsyncpa [#allocation4], 0
    %s14 = scalar_lea.sflag [#allocation4], 1
    %15 = vsyncpa %s14, 0
    loop: start=0, step=1, limit=4
    $region2: #{tpu_custom_call.1} parent=1 // loop_pre_header
      _
    $region3: #{tpu_custom_call.1} parent=1 // loop_header
      %s17 = sphi 0, %s21
      %p18 = scmp.ge.s32.totalorder %s17, 4
      %s27 = sphi 0, %s29
      %s30 = sphi 0, %s27
      %s31 = sphi 0, %s30
      %s47 = sphi 0, %s31
      %s53 = sphi 0, %s55
      %s56 = sphi 0, %s53
      %s57 = sphi 0, %s56
      %s73 = sphi 0, %s57
      %s79 = sphi 0, %s81
      %s82 = sphi 0, %s79
      %s83 = sphi 0, %s82
      %s99 = sphi 0, %s83
    $region4: #{tpu_custom_call.1} parent=1 // loop_header_branch
      %20 = sbr.rel (%p18) target = $region8
    $region5: #{tpu_custom_call.1} parent=1 // loop_body
      %s22 = ssub.s32 %s17, 1
      %s23 = ssub.s32 %s17, 2
      %s24 = sadd.s32 %s17, 1
      %s25 = ssub.s32 %s17, %s24
      %p26 = scmp.eq.s32.totalorder %s25, 0
      %s28 = sadd.s32 %s27, 1
      %s29 = scalar_select %p26, %s27, %s28
      %p32 = pneg %p26
      %p33 = scmp.eq.s32.totalorder %s17, 1
      %p34 = por %p32, %p33
      %p35 = scmp.ne.s32.totalorder %s27, %s30
      %p36 = scmp.eq.s32.totalorder %s17, 0
      %p37 = por %p35, %p36
      %p38 = scmp.ne.s32.totalorder %s27, %s30
      %p39 = scmp.eq.s32.totalorder %s22, 1
      %p40 = por %p38, %p39
      %p41 = scmp.ne.s32.totalorder %s30, %s31
      %p42 = scmp.eq.s32.totalorder %s22, 0
      %p43 = por %p41, %p42
      %p44 = scmp.ne.s32.totalorder %s30, %s31
      %p45 = scmp.eq.s32.totalorder %s23, 1
      %p46 = por %p44, %p45
      %p48 = scmp.ne.s32.totalorder %s31, %s47
      %p49 = scmp.eq.s32.totalorder %s23, 0
      %p50 = por %p48, %p49
      %s51 = ssub.s32 %s17, %s24
      %p52 = scmp.eq.s32.totalorder %s51, 0
      %s54 = sadd.s32 %s53, 1
      %s55 = scalar_select %p52, %s53, %s54
      %p58 = pneg %p52
      %p59 = scmp.eq.s32.totalorder %s17, 1
      %p60 = por %p58, %p59
      %p61 = scmp.ne.s32.totalorder %s53, %s56
      %p62 = scmp.eq.s32.totalorder %s17, 0
      %p63 = por %p61, %p62
      %p64 = scmp.ne.s32.totalorder %s53, %s56
      %p65 = scmp.eq.s32.totalorder %s22, 1
      %p66 = por %p64, %p65
      %p67 = scmp.ne.s32.totalorder %s56, %s57
      %p68 = scmp.eq.s32.totalorder %s22, 0
      %p69 = por %p67, %p68
      %p70 = scmp.ne.s32.totalorder %s56, %s57
      %p71 = scmp.eq.s32.totalorder %s23, 1
      %p72 = por %p70, %p71
      %p74 = scmp.ne.s32.totalorder %s57, %s73
      %p75 = scmp.eq.s32.totalorder %s23, 0
      %p76 = por %p74, %p75
      %s77 = ssub.s32 %s17, %s24
      %p78 = scmp.eq.s32.totalorder %s77, 0
      %s80 = sadd.s32 %s79, 1
      %s81 = scalar_select %p78, %s79, %s80
      %p84 = pneg %p78
      %p85 = scmp.eq.s32.totalorder %s17, 1
      %p86 = por %p84, %p85
      %p87 = scmp.ne.s32.totalorder %s79, %s82
      %p88 = scmp.eq.s32.totalorder %s17, 0
      %p89 = por %p87, %p88
      %p90 = scmp.ne.s32.totalorder %s79, %s82
      %p91 = scmp.eq.s32.totalorder %s22, 1
      %p92 = por %p90, %p91
      %p93 = scmp.ne.s32.totalorder %s82, %s83
      %p94 = scmp.eq.s32.totalorder %s22, 0
      %p95 = por %p93, %p94
      %p96 = scmp.ne.s32.totalorder %s82, %s83
      %p97 = scmp.eq.s32.totalorder %s23, 1
      %p98 = por %p96, %p97
      %p100 = scmp.ne.s32.totalorder %s83, %s99
      %p101 = scmp.eq.s32.totalorder %s23, 0
      %p102 = por %p100, %p101
      %p103 = scmp.le.s32.totalorder 1, %s17
      %p104 = scmp.lt.s32.totalorder %s17, 3
      %p105 = pnand %p103, %p104
      %p106 = pneg %p105
      // Predicated region
      $region9: #{tpu_custom_call.1} parent=5 // pred_check
        _
      $region10: #{tpu_custom_call.1} parent=5 // pred_check_branch
        %108 = sbr.rel (%p105) target = $region12
      $region11: #{tpu_custom_call.1} parent=5 // pred_region
        %s109 = ssub.s32 %s17, 1
      $region12: #{tpu_custom_call.1} parent=5 // pred_fallthru
        _
      %p110 = scmp.lt.s32.totalorder %s17, 2
      // Predicated region
      $region13: #{tpu_custom_call.1} parent=5 // pred_check
        %p111 = pneg %p110
      $region14: #{tpu_custom_call.1} parent=5 // pred_check_branch
        %113 = sbr.rel (%p111) target = $region16
      $region15: #{tpu_custom_call.1} parent=5 // pred_region
        // Predicated region
        $region17: #{tpu_custom_call.1} parent=15 // pred_check
          %p114 = pneg %p37
        $region18: #{tpu_custom_call.1} parent=15 // pred_check_branch
          %116 = sbr.rel (%p114) target = $region20
        $region19: #{tpu_custom_call.1} parent=15 // pred_region
          %s117 = sand.u32 %s27, 1
          %s118 = scalar_lea.sflag [#allocation3], %s117
          %s119 = sand.u32 %s27, 1
          %s120 = smul.addr %s119, 64
          %s121 = scalar_lea.vmem [#allocation2], %s120
          %s123 = ssub.s32 1024, 1024
          %124 = vsyncadd %s118, %s123
          %s125 = smul.addr %s17, 8
          %s126 = smul.addr %s125, 128
          %s127 = scalar_lea.hbm %s0, %s126
          %s128 = sshll.u32 %s121, 4
          %s129 = int_to_ptr.vmem [resolvable:$true] %s128
          %134 = dma.hbm_to_vmem [thread:$0]  %s127, 1024, %s129, %s118, 128, 128, 8
        $region20: #{tpu_custom_call.1} parent=15 // pred_fallthru
          _
        // Predicated region
        $region21: #{tpu_custom_call.1} parent=15 // pred_check
          %p135 = pneg %p63
        $region22: #{tpu_custom_call.1} parent=15 // pred_check_branch
          %137 = sbr.rel (%p135) target = $region24
        $region23: #{tpu_custom_call.1} parent=15 // pred_region
          %s138 = sand.u32 %s53, 1
          %s139 = scalar_lea.sflag [#allocation6], %s138
          %s140 = sand.u32 %s53, 1
          %s141 = smul.addr %s140, 16
          %s142 = scalar_lea.vmem [#allocation5], %s141
          %s144 = ssub.s32 256, 256
          %145 = vsyncadd %s139, %s144
          %s146 = smul.addr %s17, 2
          %s147 = smul.addr %s146, 128
          %s148 = scalar_lea.hbm %s1, %s147
          %s149 = sshll.u32 %s142, 4
          %s150 = int_to_ptr.vmem [resolvable:$true] %s149
          %155 = dma.hbm_to_vmem [thread:$0]  %s148, 256, %s150, %s139, 128, 128, 8
        $region24: #{tpu_custom_call.1} parent=15 // pred_fallthru
          _
      $region16: #{tpu_custom_call.1} parent=5 // pred_fallthru
        _
      %p156 = scmp.le.s32.totalorder 1, %s17
      %p157 = scmp.lt.s32.totalorder %s17, 3
      %p158 = pnand %p156, %p157
      %p159 = pneg %p158
      // Predicated region
      $region25: #{tpu_custom_call.1} parent=5 // pred_check
        _
      $region26: #{tpu_custom_call.1} parent=5 // pred_check_branch
        %161 = sbr.rel (%p158) target = $region28
      $region27: #{tpu_custom_call.1} parent=5 // pred_region
        %s162 = ssub.s32 %s17, 1
        %s163 = sand.u32 %s30, 1
        %s164 = scalar_lea.sflag [#allocation3], %s163
        %s165 = sand.u32 %s30, 1
        %s166 = smul.addr %s165, 64
        %s167 = scalar_lea.vmem [#allocation2], %s166
        // Predicated region
        $region29: #{tpu_custom_call.1} parent=27 // pred_check
          %p168 = pneg %p43
        $region30: #{tpu_custom_call.1} parent=27 // pred_check_branch
          %170 = sbr.rel (%p168) target = $region32
        $region31: #{tpu_custom_call.1} parent=27 // pred_region
          %171 = dma.done %s164, 1024
        $region32: #{tpu_custom_call.1} parent=27 // pred_fallthru
          _
        %s172 = sand.u32 %s56, 1
        %s173 = scalar_lea.sflag [#allocation6], %s172
        %s174 = sand.u32 %s56, 1
        %s175 = smul.addr %s174, 16
        %s176 = scalar_lea.vmem [#allocation5], %s175
        // Predicated region
        $region33: #{tpu_custom_call.1} parent=27 // pred_check
          %p177 = pneg %p69
        $region34: #{tpu_custom_call.1} parent=27 // pred_check_branch
          %179 = sbr.rel (%p177) target = $region36
        $region35: #{tpu_custom_call.1} parent=27 // pred_region
          %180 = dma.done %s173, 256
        $region36: #{tpu_custom_call.1} parent=27 // pred_fallthru
          _
        %s181 = sand.u32 %s30, 1
        %s182 = scalar_lea.sflag [#allocation3], %s181
        %s183 = sand.u32 %s30, 1
        %s184 = smul.addr %s183, 64
        %s185 = scalar_lea.vmem [#allocation2], %s184
        %p186 = pneg %p43
        %p187 = pneg %p40
        %s188 = sand.u32 %s56, 1
        %s189 = scalar_lea.sflag [#allocation6], %s188
        %s190 = sand.u32 %s56, 1
        %s191 = smul.addr %s190, 16
        %s192 = scalar_lea.vmem [#allocation5], %s191
        %p193 = pneg %p69
        %p194 = pneg %p66
        %p195 = pneg %p95
        %p196 = pneg %p92
        %s197 = sand.u32 %s82, 1
        %s198 = scalar_lea.sflag [#allocation4], %s197
        %s199 = sand.u32 %s82, 1
        %s200 = smul.addr %s199, 8
        %s201 = scalar_lea.vmem [#allocation7], %s200
        %v202 = vld [vmem:[%s167] sm:$0xff]
        %v203 = vld [vmem:[%s167 + $0x8] sm:$0xff]
        %s204 = scalar_lea.vmem %s167, 16 [#allocation2]
        %v205 = vld [vmem:[%s204] sm:$0xff]
        %v206 = vld [vmem:[%s204 + $0x8] sm:$0xff]
        %v207 = vmax.f32 %v202, %v205
        %v208 = vmax.f32 %v203, %v206
        %s209 = scalar_lea.vmem %s167, 32 [#allocation2]
        %v210 = vld [vmem:[%s209] sm:$0xff]
        %v211 = vld [vmem:[%s209 + $0x8] sm:$0xff]
        %v212 = vmax.f32 %v207, %v210
        %v213 = vmax.f32 %v208, %v211
        %s214 = scalar_lea.vmem %s167, 48 [#allocation2]
        %v215 = vld [vmem:[%s214] sm:$0xff]
        %v216 = vld [vmem:[%s214 + $0x8] sm:$0xff]
        %v217 = vmax.f32 %v212, %v215
        %v218 = vmax.f32 %v213, %v216
        %v219 = vsub.f32 %v202, %v217
        %v220 = vsub.f32 %v203, %v218
        %v221 = vmul.f32 %v219, 1.442695
        %v222 = vpow.pop %v221
        %v223 = vmul.f32 %v220, 1.442695
        %v224 = vpow.pop %v223
        %v225 = vadd.f32 %v222, 0.0
        %v226 = vadd.f32 %v224, 0.0
        %v227 = vsub.f32 %v205, %v217
        %v228 = vsub.f32 %v206, %v218
        %v229 = vmul.f32 %v227, 1.442695
        %v230 = vpow.pop %v229
        %v231 = vmul.f32 %v228, 1.442695
        %v232 = vpow.pop %v231
        %v233 = vadd.f32 %v225, %v230
        %v234 = vadd.f32 %v226, %v232
        %v235 = vsub.f32 %v210, %v217
        %v236 = vsub.f32 %v211, %v218
        %v237 = vmul.f32 %v235, 1.442695
        %v238 = vpow.pop %v237
        %v239 = vmul.f32 %v236, 1.442695
        %v240 = vpow.pop %v239
        %v241 = vadd.f32 %v233, %v238
        %v242 = vadd.f32 %v234, %v240
        %v243 = vsub.f32 %v215, %v217
        %v244 = vsub.f32 %v216, %v218
        %v245 = vmul.f32 %v243, 1.442695
        %v246 = vpow.pop %v245
        %v247 = vmul.f32 %v244, 1.442695
        %v248 = vpow.pop %v247
        %v249 = vadd.f32 %v241, %v246
        %v250 = vadd.f32 %v242, %v248
        %v251 = vrcp.pop %v249
        %v252 = vrcp.pop %v250
        %v253 = vld [vmem:[%s176] sm:$0xff]
        %v254 = vld [vmem:[%s176 + $0x8] sm:$0xff]
        %v255 = vmul.f32 %v222, %v251
        %v256 = vmul.f32 %v224, %v252
        %vm257 = vcmp.eq.s32.totalorder %v253, 0
        %vm258 = vcmp.eq.s32.totalorder %v254, 0
        %v259 = vsel %vm257, 1, 0
        %v260 = vsel %vm258, 1, 0
        %v261 = vcvt.s32.f32 %v259
        %v262 = vcvt.s32.f32 %v260
        %v263 = vsub.f32 1.0, %v261
        %v264 = vsub.f32 1.0, %v262
        %v265 = vsub.f32 1.0, %v255
        %v266 = vsub.f32 1.0, %v256
        %vm269 = vcmask 1040384
        %v270 = vrot.slane %v263, 7
        %v271 = vrot.slane %v264, 7
        %v272 = vsel %vm269, %v270, %v271
        %v276 = vsel %vm269, 0.0, %v270
        %v277 = vsel %vm269, %v271, 0.0
        %v278 = vmax.f32 %v263, %v276
        %v279 = vmax.f32 %v264, %v272
        %vm282 = vcmask 1045504
        %v283 = vrot.slane %v276, 2
        %v284 = vrot.slane %v272, 2
        %v285 = vsel %vm282, %v283, %v284
        %v286 = vrot.slane %v277, 2
        %v287 = vsel %vm282, %v284, %v286
        %v290 = vmax.f32 %v278, %v285
        %v291 = vmax.f32 %v279, %v287
        %294 = vrot.lane.b32.xlu0 %v290, 1
        %v295 = vpop.permute.xlu0 %294
        %296 = vrot.lane.b32.xlu0 %v291, 1
        %v297 = vpop.permute.xlu0 %296
        %vm300 = vcmask 7168
        %v301 = vsel %vm300, 0.0, %v295
        %v302 = vsel %vm300, 0.0, %v297
        %vm303 = vcmask 138240
        %v304 = vsel %vm303, %v301, 0.0
        %v305 = vsel %vm303, %v302, 0.0
        %v306 = vmax.f32 %v290, %v304
        %v307 = vmax.f32 %v291, %v305
        %310 = vrot.lane.b32.xlu0 %v304, 126
        %v311 = vpop.permute.xlu0 %310
        %312 = vrot.lane.b32.xlu0 %v305, 126
        %v313 = vpop.permute.xlu0 %312
        %v316 = vmax.f32 %v306, %v311
        %v317 = vmax.f32 %v307, %v313
        %v318 = vsub.f32 %v316, %v263
        %v319 = vsub.f32 %v317, %v264
        %v322 = vrot.slane %v265, 7
        %v323 = vrot.slane %v266, 7
        %v324 = vsel %vm269, %v322, %v323
        %v328 = vsel %vm269, 0.0, %v322
        %v329 = vsel %vm269, %v323, 0.0
        %v330 = vmax.f32 %v265, %v328
        %v331 = vmax.f32 %v266, %v324
        %v334 = vrot.slane %v328, 2
        %v335 = vrot.slane %v324, 2
        %v336 = vsel %vm282, %v334, %v335
        %v337 = vrot.slane %v329, 2
        %v338 = vsel %vm282, %v335, %v337
        %v341 = vmax.f32 %v330, %v336
        %v342 = vmax.f32 %v331, %v338
        %345 = vrot.lane.b32.xlu0 %v341, 1
        %v346 = vpop.permute.xlu0 %345
        %347 = vrot.lane.b32.xlu0 %v342, 1
        %v348 = vpop.permute.xlu0 %347
        %v351 = vsel %vm300, 0.0, %v346
        %v352 = vsel %vm300, 0.0, %v348
        %v353 = vsel %vm303, %v351, 0.0
        %v354 = vsel %vm303, %v352, 0.0
        %v355 = vmax.f32 %v341, %v353
        %v356 = vmax.f32 %v342, %v354
        %359 = vrot.lane.b32.xlu0 %v353, 126
        %v360 = vpop.permute.xlu0 %359
        %361 = vrot.lane.b32.xlu0 %v354, 126
        %v362 = vpop.permute.xlu0 %361
        %v365 = vmax.f32 %v355, %v360
        %v366 = vmax.f32 %v356, %v362
        %v367 = vsub.f32 %v365, %v265
        %v368 = vsub.f32 %v366, %v266
        %vm371 = vcmask 1041408
        %v372 = vrot.slane %v318, 6
        %v373 = vrot.slane %v319, 6
        %v374 = vsel %vm371, %v372, %v373
        %v378 = vsel %vm371, 0.0, %v372
        %v379 = vsel %vm371, %v373, 0.0
        %v380 = vmax.f32 %v318, %v378
        %v381 = vmax.f32 %v319, %v374
        %vm384 = vcmask 1046528
        %v385 = vrot.slane %v378, 1
        %v386 = vrot.slane %v374, 1
        %v387 = vsel %vm384, %v385, %v386
        %v388 = vrot.slane %v379, 1
        %v389 = vsel %vm384, %v386, %v388
        %v392 = vmax.f32 %v380, %v387
        %v393 = vmax.f32 %v381, %v389
        %vm394 = vcmask 1044480
        %v395 = vrot.slane %v378, 3
        %v396 = vrot.slane %v374, 3
        %v397 = vsel %vm394, %v395, %v396
        %v398 = vrot.slane %v379, 3
        %v399 = vsel %vm394, %v396, %v398
        %v402 = vmax.f32 %v392, %v397
        %v403 = vmax.f32 %v393, %v399
        %vm404 = vcmask 1043456
        %v405 = vrot.slane %v378, 4
        %v406 = vrot.slane %v374, 4
        %v407 = vsel %vm404, %v405, %v406
        %v408 = vrot.slane %v379, 4
        %v409 = vsel %vm404, %v406, %v408
        %v412 = vmax.f32 %v402, %v407
        %v413 = vmax.f32 %v403, %v409
        %416 = vrot.lane.b32.xlu0 %v412, 2
        %v417 = vpop.permute.xlu0 %416
        %418 = vrot.lane.b32.xlu0 %v413, 2
        %v419 = vpop.permute.xlu0 %418
        %vm422 = vcmask 15360
        %v423 = vsel %vm422, 0.0, %v417
        %v424 = vsel %vm422, 0.0, %v419
        %vm425 = vcmask 146432
        %v426 = vsel %vm425, %v423, 0.0
        %v427 = vsel %vm425, %v424, 0.0
        %v428 = vmax.f32 %v412, %v426
        %v429 = vmax.f32 %v413, %v427
        %432 = vrot.lane.b32.xlu0 %v426, 127
        %v433 = vpop.permute.xlu0 %432
        %434 = vrot.lane.b32.xlu0 %v427, 127
        %v435 = vpop.permute.xlu0 %434
        %v438 = vmax.f32 %v428, %v433
        %v439 = vmax.f32 %v429, %v435
        %440 = vrot.lane.b32.xlu0 %v426, 125
        %v441 = vpop.permute.xlu0 %440
        %442 = vrot.lane.b32.xlu0 %v427, 125
        %v443 = vpop.permute.xlu0 %442
        %v446 = vmax.f32 %v438, %v441
        %v447 = vmax.f32 %v439, %v443
        %448 = vrot.lane.b32.xlu0 %v426, 124
        %v449 = vpop.permute.xlu0 %448
        %450 = vrot.lane.b32.xlu0 %v427, 124
        %v451 = vpop.permute.xlu0 %450
        %v454 = vmax.f32 %v446, %v449
        %v455 = vmax.f32 %v447, %v451
        %v458 = vrot.slane %v367, 6
        %v459 = vrot.slane %v368, 6
        %v460 = vsel %vm371, %v458, %v459
        %v464 = vsel %vm371, 0.0, %v458
        %v465 = vsel %vm371, %v459, 0.0
        %v466 = vmax.f32 %v367, %v464
        %v467 = vmax.f32 %v368, %v460
        %v470 = vrot.slane %v464, 1
        %v471 = vrot.slane %v460, 1
        %v472 = vsel %vm384, %v470, %v471
        %v473 = vrot.slane %v465, 1
        %v474 = vsel %vm384, %v471, %v473
        %v477 = vmax.f32 %v466, %v472
        %v478 = vmax.f32 %v467, %v474
        %v479 = vrot.slane %v464, 3
        %v480 = vrot.slane %v460, 3
        %v481 = vsel %vm394, %v479, %v480
        %v482 = vrot.slane %v465, 3
        %v483 = vsel %vm394, %v480, %v482
        %v486 = vmax.f32 %v477, %v481
        %v487 = vmax.f32 %v478, %v483
        %v488 = vrot.slane %v464, 4
        %v489 = vrot.slane %v460, 4
        %v490 = vsel %vm404, %v488, %v489
        %v491 = vrot.slane %v465, 4
        %v492 = vsel %vm404, %v489, %v491
        %v495 = vmax.f32 %v486, %v490
        %v496 = vmax.f32 %v487, %v492
        %499 = vrot.lane.b32.xlu0 %v495, 2
        %v500 = vpop.permute.xlu0 %499
        %501 = vrot.lane.b32.xlu0 %v496, 2
        %v502 = vpop.permute.xlu0 %501
        %v505 = vsel %vm422, 0.0, %v500
        %v506 = vsel %vm422, 0.0, %v502
        %v507 = vsel %vm425, %v505, 0.0
        %v508 = vsel %vm425, %v506, 0.0
        %v509 = vmax.f32 %v495, %v507
        %v510 = vmax.f32 %v496, %v508
        %513 = vrot.lane.b32.xlu0 %v507, 127
        %v514 = vpop.permute.xlu0 %513
        %515 = vrot.lane.b32.xlu0 %v508, 127
        %v516 = vpop.permute.xlu0 %515
        %v519 = vmax.f32 %v509, %v514
        %v520 = vmax.f32 %v510, %v516
        %521 = vrot.lane.b32.xlu0 %v507, 125
        %v522 = vpop.permute.xlu0 %521
        %523 = vrot.lane.b32.xlu0 %v508, 125
        %v524 = vpop.permute.xlu0 %523
        %v527 = vmax.f32 %v519, %v522
        %v528 = vmax.f32 %v520, %v524
        %529 = vrot.lane.b32.xlu0 %v507, 124
        %v530 = vpop.permute.xlu0 %529
        %531 = vrot.lane.b32.xlu0 %v508, 124
        %v532 = vpop.permute.xlu0 %531
        %v535 = vmax.f32 %v527, %v530
        %v536 = vmax.f32 %v528, %v532
        %v537 = vmul.f32 %v367, %v454
        %v538 = vmul.f32 %v368, %v455
        %vm539 = vcmask 130048
        %v540 = vsel %vm539, %v537, 0.0
        %v541 = vsel %vm539, %v538, 0.0
        %v542 = vadd.f32 %v540, %v541
        %543 = vadd.xlane.f32.xlu0 %v542
        %v544 = vpop.xlane.xlu0 %543
        %v545 = vrot.slane %v544, 4
        %v546 = vadd.f32 %v544, %v545
        %v547 = vrot.slane %v546, 2
        %v548 = vadd.f32 %v546, %v547
        %v549 = vrot.slane %v548, 1
        %v550 = vadd.f32 %v548, %v549
        %s551 = vtos %v550
        %v552 = vsel %vm539, %v367, 0.0
        %v553 = vsel %vm539, %v368, 0.0
        %v554 = vadd.f32 %v552, %v553
        %555 = vadd.xlane.f32.xlu0 %v554
        %v556 = vpop.xlane.xlu0 %555
        %v557 = vrot.slane %v556, 4
        %v558 = vadd.f32 %v556, %v557
        %v559 = vrot.slane %v558, 2
        %v560 = vadd.f32 %v558, %v559
        %v561 = vrot.slane %v560, 1
        %v562 = vadd.f32 %v560, %v561
        %s563 = vtos %v562
        %s564 = sadd.f32 %s563, 1e-07
        %v565 = vstv %s564
        %v566 = vrcp.pop %v565
        %s567 = vtos %v566
        %s568 = smul.f32 %s551, %s567
        %v569 = vmul.f32 %v535, %v318
        %v570 = vmul.f32 %v536, %v319
        %v571 = vsel %vm539, %v569, 0.0
        %v572 = vsel %vm539, %v570, 0.0
        %v573 = vadd.f32 %v571, %v572
        %574 = vadd.xlane.f32.xlu0 %v573
        %v575 = vpop.xlane.xlu0 %574
        %v576 = vrot.slane %v575, 4
        %v577 = vadd.f32 %v575, %v576
        %v578 = vrot.slane %v577, 2
        %v579 = vadd.f32 %v577, %v578
        %v580 = vrot.slane %v579, 1
        %v581 = vadd.f32 %v579, %v580
        %s582 = vtos %v581
        %v583 = vsel %vm539, %v318, 0.0
        %v584 = vsel %vm539, %v319, 0.0
        %v585 = vadd.f32 %v583, %v584
        %586 = vadd.xlane.f32.xlu0 %v585
        %v587 = vpop.xlane.xlu0 %586
        %v588 = vrot.slane %v587, 4
        %v589 = vadd.f32 %v587, %v588
        %v590 = vrot.slane %v589, 2
        %v591 = vadd.f32 %v589, %v590
        %v592 = vrot.slane %v591, 1
        %v593 = vadd.f32 %v591, %v592
        %s594 = vtos %v593
        %s595 = sadd.f32 %s594, 1e-07
        %v596 = vstv %s595
        %v597 = vrcp.pop %v596
        %s598 = vtos %v597
        %s599 = smul.f32 %s582, %s598
        %s600 = smul.f32 %s568, 2.0
        %s601 = smul.f32 %s600, %s599
        %s602 = sadd.f32 %s568, %s599
        %s603 = sadd.f32 %s602, 1e-07
        %v604 = vstv %s603
        %v605 = vrcp.pop %v604
        %s606 = vtos %v605
        %s607 = smul.f32 %s601, %s606
        %s608 = sadd.f32 %s607, 0.0
        %v609 = vmul.f32 %v230, %v251
        %v610 = vmul.f32 %v232, %v252
        %vm611 = vcmp.eq.s32.totalorder %v253, 1
        %vm612 = vcmp.eq.s32.totalorder %v254, 1
        %v613 = vsel %vm611, 1, 0
        %v614 = vsel %vm612, 1, 0
        %v615 = vcvt.s32.f32 %v613
        %v616 = vcvt.s32.f32 %v614
        %v617 = vsub.f32 1.0, %v615
        %v618 = vsub.f32 1.0, %v616
        %v619 = vsub.f32 1.0, %v609
        %v620 = vsub.f32 1.0, %v610
        %v623 = vrot.slane %v617, 7
        %v624 = vrot.slane %v618, 7
        %v625 = vsel %vm269, %v623, %v624
        %v629 = vsel %vm269, 0.0, %v623
        %v630 = vsel %vm269, %v624, 0.0
        %v631 = vmax.f32 %v617, %v629
        %v632 = vmax.f32 %v618, %v625
        %v635 = vrot.slane %v629, 2
        %v636 = vrot.slane %v625, 2
        %v637 = vsel %vm282, %v635, %v636
        %v638 = vrot.slane %v630, 2
        %v639 = vsel %vm282, %v636, %v638
        %v642 = vmax.f32 %v631, %v637
        %v643 = vmax.f32 %v632, %v639
        %646 = vrot.lane.b32.xlu0 %v642, 1
        %v647 = vpop.permute.xlu0 %646
        %648 = vrot.lane.b32.xlu0 %v643, 1
        %v649 = vpop.permute.xlu0 %648
        %v652 = vsel %vm300, 0.0, %v647
        %v653 = vsel %vm300, 0.0, %v649
        %v654 = vsel %vm303, %v652, 0.0
        %v655 = vsel %vm303, %v653, 0.0
        %v656 = vmax.f32 %v642, %v654
        %v657 = vmax.f32 %v643, %v655
        %660 = vrot.lane.b32.xlu0 %v654, 126
        %v661 = vpop.permute.xlu0 %660
        %662 = vrot.lane.b32.xlu0 %v655, 126
        %v663 = vpop.permute.xlu0 %662
        %v666 = vmax.f32 %v656, %v661
        %v667 = vmax.f32 %v657, %v663
        %v668 = vsub.f32 %v666, %v617
        %v669 = vsub.f32 %v667, %v618
        %v672 = vrot.slane %v619, 7
        %v673 = vrot.slane %v620, 7
        %v674 = vsel %vm269, %v672, %v673
        %v678 = vsel %vm269, 0.0, %v672
        %v679 = vsel %vm269, %v673, 0.0
        %v680 = vmax.f32 %v619, %v678
        %v681 = vmax.f32 %v620, %v674
        %v684 = vrot.slane %v678, 2
        %v685 = vrot.slane %v674, 2
        %v686 = vsel %vm282, %v684, %v685
        %v687 = vrot.slane %v679, 2
        %v688 = vsel %vm282, %v685, %v687
        %v691 = vmax.f32 %v680, %v686
        %v692 = vmax.f32 %v681, %v688
        %695 = vrot.lane.b32.xlu0 %v691, 1
        %v696 = vpop.permute.xlu0 %695
        %697 = vrot.lane.b32.xlu0 %v692, 1
        %v698 = vpop.permute.xlu0 %697
        %v701 = vsel %vm300, 0.0, %v696
        %v702 = vsel %vm300, 0.0, %v698
        %v703 = vsel %vm303, %v701, 0.0
        %v704 = vsel %vm303, %v702, 0.0
        %v705 = vmax.f32 %v691, %v703
        %v706 = vmax.f32 %v692, %v704
        %709 = vrot.lane.b32.xlu0 %v703, 126
        %v710 = vpop.permute.xlu0 %709
        %711 = vrot.lane.b32.xlu0 %v704, 126
        %v712 = vpop.permute.xlu0 %711
        %v715 = vmax.f32 %v705, %v710
        %v716 = vmax.f32 %v706, %v712
        %v717 = vsub.f32 %v715, %v619
        %v718 = vsub.f32 %v716, %v620
        %v721 = vrot.slane %v668, 6
        %v722 = vrot.slane %v669, 6
        %v723 = vsel %vm371, %v721, %v722
        %v727 = vsel %vm371, 0.0, %v721
        %v728 = vsel %vm371, %v722, 0.0
        %v729 = vmax.f32 %v668, %v727
        %v730 = vmax.f32 %v669, %v723
        %v733 = vrot.slane %v727, 1
        %v734 = vrot.slane %v723, 1
        %v735 = vsel %vm384, %v733, %v734
        %v736 = vrot.slane %v728, 1
        %v737 = vsel %vm384, %v734, %v736
        %v740 = vmax.f32 %v729, %v735
        %v741 = vmax.f32 %v730, %v737
        %v742 = vrot.slane %v727, 3
        %v743 = vrot.slane %v723, 3
        %v744 = vsel %vm394, %v742, %v743
        %v745 = vrot.slane %v728, 3
        %v746 = vsel %vm394, %v743, %v745
        %v749 = vmax.f32 %v740, %v744
        %v750 = vmax.f32 %v741, %v746
        %v751 = vrot.slane %v727, 4
        %v752 = vrot.slane %v723, 4
        %v753 = vsel %vm404, %v751, %v752
        %v754 = vrot.slane %v728, 4
        %v755 = vsel %vm404, %v752, %v754
        %v758 = vmax.f32 %v749, %v753
        %v759 = vmax.f32 %v750, %v755
        %762 = vrot.lane.b32.xlu0 %v758, 2
        %v763 = vpop.permute.xlu0 %762
        %764 = vrot.lane.b32.xlu0 %v759, 2
        %v765 = vpop.permute.xlu0 %764
        %v768 = vsel %vm422, 0.0, %v763
        %v769 = vsel %vm422, 0.0, %v765
        %v770 = vsel %vm425, %v768, 0.0
        %v771 = vsel %vm425, %v769, 0.0
        %v772 = vmax.f32 %v758, %v770
        %v773 = vmax.f32 %v759, %v771
        %776 = vrot.lane.b32.xlu0 %v770, 127
        %v777 = vpop.permute.xlu0 %776
        %778 = vrot.lane.b32.xlu0 %v771, 127
        %v779 = vpop.permute.xlu0 %778
        %v782 = vmax.f32 %v772, %v777
        %v783 = vmax.f32 %v773, %v779
        %784 = vrot.lane.b32.xlu0 %v770, 125
        %v785 = vpop.permute.xlu0 %784
        %786 = vrot.lane.b32.xlu0 %v771, 125
        %v787 = vpop.permute.xlu0 %786
        %v790 = vmax.f32 %v782, %v785
        %v791 = vmax.f32 %v783, %v787
        %792 = vrot.lane.b32.xlu0 %v770, 124
        %v793 = vpop.permute.xlu0 %792
        %794 = vrot.lane.b32.xlu0 %v771, 124
        %v795 = vpop.permute.xlu0 %794
        %v798 = vmax.f32 %v790, %v793
        %v799 = vmax.f32 %v791, %v795
        %v802 = vrot.slane %v717, 6
        %v803 = vrot.slane %v718, 6
        %v804 = vsel %vm371, %v802, %v803
        %v808 = vsel %vm371, 0.0, %v802
        %v809 = vsel %vm371, %v803, 0.0
        %v810 = vmax.f32 %v717, %v808
        %v811 = vmax.f32 %v718, %v804
        %v814 = vrot.slane %v808, 1
        %v815 = vrot.slane %v804, 1
        %v816 = vsel %vm384, %v814, %v815
        %v817 = vrot.slane %v809, 1
        %v818 = vsel %vm384, %v815, %v817
        %v821 = vmax.f32 %v810, %v816
        %v822 = vmax.f32 %v811, %v818
        %v823 = vrot.slane %v808, 3
        %v824 = vrot.slane %v804, 3
        %v825 = vsel %vm394, %v823, %v824
        %v826 = vrot.slane %v809, 3
        %v827 = vsel %vm394, %v824, %v826
        %v830 = vmax.f32 %v821, %v825
        %v831 = vmax.f32 %v822, %v827
        %v832 = vrot.slane %v808, 4
        %v833 = vrot.slane %v804, 4
        %v834 = vsel %vm404, %v832, %v833
        %v835 = vrot.slane %v809, 4
        %v836 = vsel %vm404, %v833, %v835
        %v839 = vmax.f32 %v830, %v834
        %v840 = vmax.f32 %v831, %v836
        %843 = vrot.lane.b32.xlu0 %v839, 2
        %v844 = vpop.permute.xlu0 %843
        %845 = vrot.lane.b32.xlu0 %v840, 2
        %v846 = vpop.permute.xlu0 %845
        %v849 = vsel %vm422, 0.0, %v844
        %v850 = vsel %vm422, 0.0, %v846
        %v851 = vsel %vm425, %v849, 0.0
        %v852 = vsel %vm425, %v850, 0.0
        %v853 = vmax.f32 %v839, %v851
        %v854 = vmax.f32 %v840, %v852
        %857 = vrot.lane.b32.xlu0 %v851, 127
        %v858 = vpop.permute.xlu0 %857
        %859 = vrot.lane.b32.xlu0 %v852, 127
        %v860 = vpop.permute.xlu0 %859
        %v863 = vmax.f32 %v853, %v858
        %v864 = vmax.f32 %v854, %v860
        %865 = vrot.lane.b32.xlu0 %v851, 125
        %v866 = vpop.permute.xlu0 %865
        %867 = vrot.lane.b32.xlu0 %v852, 125
        %v868 = vpop.permute.xlu0 %867
        %v871 = vmax.f32 %v863, %v866
        %v872 = vmax.f32 %v864, %v868
        %873 = vrot.lane.b32.xlu0 %v851, 124
        %v874 = vpop.permute.xlu0 %873
        %875 = vrot.lane.b32.xlu0 %v852, 124
        %v876 = vpop.permute.xlu0 %875
        %v879 = vmax.f32 %v871, %v874
        %v880 = vmax.f32 %v872, %v876
        %v881 = vmul.f32 %v717, %v798
        %v882 = vmul.f32 %v718, %v799
        %v883 = vsel %vm539, %v881, 0.0
        %v884 = vsel %vm539, %v882, 0.0
        %v885 = vadd.f32 %v883, %v884
        %886 = vadd.xlane.f32.xlu0 %v885
        %v887 = vpop.xlane.xlu0 %886
        %v888 = vrot.slane %v887, 4
        %v889 = vadd.f32 %v887, %v888
        %v890 = vrot.slane %v889, 2
        %v891 = vadd.f32 %v889, %v890
        %v892 = vrot.slane %v891, 1
        %v893 = vadd.f32 %v891, %v892
        %s894 = vtos %v893
        %v895 = vsel %vm539, %v717, 0.0
        %v896 = vsel %vm539, %v718, 0.0
        %v897 = vadd.f32 %v895, %v896
        %898 = vadd.xlane.f32.xlu0 %v897
        %v899 = vpop.xlane.xlu0 %898
        %v900 = vrot.slane %v899, 4
        %v901 = vadd.f32 %v899, %v900
        %v902 = vrot.slane %v901, 2
        %v903 = vadd.f32 %v901, %v902
        %v904 = vrot.slane %v903, 1
        %v905 = vadd.f32 %v903, %v904
        %s906 = vtos %v905
        %s907 = sadd.f32 %s906, 1e-07
        %v908 = vstv %s907
        %v909 = vrcp.pop %v908
        %s910 = vtos %v909
        %s911 = smul.f32 %s894, %s910
        %v912 = vmul.f32 %v879, %v668
        %v913 = vmul.f32 %v880, %v669
        %v914 = vsel %vm539, %v912, 0.0
        %v915 = vsel %vm539, %v913, 0.0
        %v916 = vadd.f32 %v914, %v915
        %917 = vadd.xlane.f32.xlu0 %v916
        %v918 = vpop.xlane.xlu0 %917
        %v919 = vrot.slane %v918, 4
        %v920 = vadd.f32 %v918, %v919
        %v921 = vrot.slane %v920, 2
        %v922 = vadd.f32 %v920, %v921
        %v923 = vrot.slane %v922, 1
        %v924 = vadd.f32 %v922, %v923
        %s925 = vtos %v924
        %v926 = vsel %vm539, %v668, 0.0
        %v927 = vsel %vm539, %v669, 0.0
        %v928 = vadd.f32 %v926, %v927
        %929 = vadd.xlane.f32.xlu0 %v928
        %v930 = vpop.xlane.xlu0 %929
        %v931 = vrot.slane %v930, 4
        %v932 = vadd.f32 %v930, %v931
        %v933 = vrot.slane %v932, 2
        %v934 = vadd.f32 %v932, %v933
        %v935 = vrot.slane %v934, 1
        %v936 = vadd.f32 %v934, %v935
        %s937 = vtos %v936
        %s938 = sadd.f32 %s937, 1e-07
        %v939 = vstv %s938
        %v940 = vrcp.pop %v939
        %s941 = vtos %v940
        %s942 = smul.f32 %s925, %s941
        %s943 = smul.f32 %s911, 2.0
        %s944 = smul.f32 %s943, %s942
        %s945 = sadd.f32 %s911, %s942
        %s946 = sadd.f32 %s945, 1e-07
        %v947 = vstv %s946
        %v948 = vrcp.pop %v947
        %s949 = vtos %v948
        %s950 = smul.f32 %s944, %s949
        %s951 = sadd.f32 %s608, %s950
        %v952 = vmul.f32 %v238, %v251
        %v953 = vmul.f32 %v240, %v252
        %vm954 = vcmp.eq.s32.totalorder %v253, 2
        %vm955 = vcmp.eq.s32.totalorder %v254, 2
        %v956 = vsel %vm954, 1, 0
        %v957 = vsel %vm955, 1, 0
        %v958 = vcvt.s32.f32 %v956
        %v959 = vcvt.s32.f32 %v957
        %v960 = vsub.f32 1.0, %v958
        %v961 = vsub.f32 1.0, %v959
        %v962 = vsub.f32 1.0, %v952
        %v963 = vsub.f32 1.0, %v953
        %v966 = vrot.slane %v960, 7
        %v967 = vrot.slane %v961, 7
        %v968 = vsel %vm269, %v966, %v967
        %v972 = vsel %vm269, 0.0, %v966
        %v973 = vsel %vm269, %v967, 0.0
        %v974 = vmax.f32 %v960, %v972
        %v975 = vmax.f32 %v961, %v968
        %v978 = vrot.slane %v972, 2
        %v979 = vrot.slane %v968, 2
        %v980 = vsel %vm282, %v978, %v979
        %v981 = vrot.slane %v973, 2
        %v982 = vsel %vm282, %v979, %v981
        %v985 = vmax.f32 %v974, %v980
        %v986 = vmax.f32 %v975, %v982
        %989 = vrot.lane.b32.xlu0 %v985, 1
        %v990 = vpop.permute.xlu0 %989
        %991 = vrot.lane.b32.xlu0 %v986, 1
        %v992 = vpop.permute.xlu0 %991
        %v995 = vsel %vm300, 0.0, %v990
        %v996 = vsel %vm300, 0.0, %v992
        %v997 = vsel %vm303, %v995, 0.0
        %v998 = vsel %vm303, %v996, 0.0
        %v999 = vmax.f32 %v985, %v997
        %v1000 = vmax.f32 %v986, %v998
        %1003 = vrot.lane.b32.xlu0 %v997, 126
        %v1004 = vpop.permute.xlu0 %1003
        %1005 = vrot.lane.b32.xlu0 %v998, 126
        %v1006 = vpop.permute.xlu0 %1005
        %v1009 = vmax.f32 %v999, %v1004
        %v1010 = vmax.f32 %v1000, %v1006
        %v1011 = vsub.f32 %v1009, %v960
        %v1012 = vsub.f32 %v1010, %v961
        %v1015 = vrot.slane %v962, 7
        %v1016 = vrot.slane %v963, 7
        %v1017 = vsel %vm269, %v1015, %v1016
        %v1021 = vsel %vm269, 0.0, %v1015
        %v1022 = vsel %vm269, %v1016, 0.0
        %v1023 = vmax.f32 %v962, %v1021
        %v1024 = vmax.f32 %v963, %v1017
        %v1027 = vrot.slane %v1021, 2
        %v1028 = vrot.slane %v1017, 2
        %v1029 = vsel %vm282, %v1027, %v1028
        %v1030 = vrot.slane %v1022, 2
        %v1031 = vsel %vm282, %v1028, %v1030
        %v1034 = vmax.f32 %v1023, %v1029
        %v1035 = vmax.f32 %v1024, %v1031
        %1038 = vrot.lane.b32.xlu0 %v1034, 1
        %v1039 = vpop.permute.xlu0 %1038
        %1040 = vrot.lane.b32.xlu0 %v1035, 1
        %v1041 = vpop.permute.xlu0 %1040
        %v1044 = vsel %vm300, 0.0, %v1039
        %v1045 = vsel %vm300, 0.0, %v1041
        %v1046 = vsel %vm303, %v1044, 0.0
        %v1047 = vsel %vm303, %v1045, 0.0
        %v1048 = vmax.f32 %v1034, %v1046
        %v1049 = vmax.f32 %v1035, %v1047
        %1052 = vrot.lane.b32.xlu0 %v1046, 126
        %v1053 = vpop.permute.xlu0 %1052
        %1054 = vrot.lane.b32.xlu0 %v1047, 126
        %v1055 = vpop.permute.xlu0 %1054
        %v1058 = vmax.f32 %v1048, %v1053
        %v1059 = vmax.f32 %v1049, %v1055
        %v1060 = vsub.f32 %v1058, %v962
        %v1061 = vsub.f32 %v1059, %v963
        %v1064 = vrot.slane %v1011, 6
        %v1065 = vrot.slane %v1012, 6
        %v1066 = vsel %vm371, %v1064, %v1065
        %v1070 = vsel %vm371, 0.0, %v1064
        %v1071 = vsel %vm371, %v1065, 0.0
        %v1072 = vmax.f32 %v1011, %v1070
        %v1073 = vmax.f32 %v1012, %v1066
        %v1076 = vrot.slane %v1070, 1
        %v1077 = vrot.slane %v1066, 1
        %v1078 = vsel %vm384, %v1076, %v1077
        %v1079 = vrot.slane %v1071, 1
        %v1080 = vsel %vm384, %v1077, %v1079
        %v1083 = vmax.f32 %v1072, %v1078
        %v1084 = vmax.f32 %v1073, %v1080
        %v1085 = vrot.slane %v1070, 3
        %v1086 = vrot.slane %v1066, 3
        %v1087 = vsel %vm394, %v1085, %v1086
        %v1088 = vrot.slane %v1071, 3
        %v1089 = vsel %vm394, %v1086, %v1088
        %v1092 = vmax.f32 %v1083, %v1087
        %v1093 = vmax.f32 %v1084, %v1089
        %v1094 = vrot.slane %v1070, 4
        %v1095 = vrot.slane %v1066, 4
        %v1096 = vsel %vm404, %v1094, %v1095
        %v1097 = vrot.slane %v1071, 4
        %v1098 = vsel %vm404, %v1095, %v1097
        %v1101 = vmax.f32 %v1092, %v1096
        %v1102 = vmax.f32 %v1093, %v1098
        %1105 = vrot.lane.b32.xlu0 %v1101, 2
        %v1106 = vpop.permute.xlu0 %1105
        %1107 = vrot.lane.b32.xlu0 %v1102, 2
        %v1108 = vpop.permute.xlu0 %1107
        %v1111 = vsel %vm422, 0.0, %v1106
        %v1112 = vsel %vm422, 0.0, %v1108
        %v1113 = vsel %vm425, %v1111, 0.0
        %v1114 = vsel %vm425, %v1112, 0.0
        %v1115 = vmax.f32 %v1101, %v1113
        %v1116 = vmax.f32 %v1102, %v1114
        %1119 = vrot.lane.b32.xlu0 %v1113, 127
        %v1120 = vpop.permute.xlu0 %1119
        %1121 = vrot.lane.b32.xlu0 %v1114, 127
        %v1122 = vpop.permute.xlu0 %1121
        %v1125 = vmax.f32 %v1115, %v1120
        %v1126 = vmax.f32 %v1116, %v1122
        %1127 = vrot.lane.b32.xlu0 %v1113, 125
        %v1128 = vpop.permute.xlu0 %1127
        %1129 = vrot.lane.b32.xlu0 %v1114, 125
        %v1130 = vpop.permute.xlu0 %1129
        %v1133 = vmax.f32 %v1125, %v1128
        %v1134 = vmax.f32 %v1126, %v1130
        %1135 = vrot.lane.b32.xlu0 %v1113, 124
        %v1136 = vpop.permute.xlu0 %1135
        %1137 = vrot.lane.b32.xlu0 %v1114, 124
        %v1138 = vpop.permute.xlu0 %1137
        %v1141 = vmax.f32 %v1133, %v1136
        %v1142 = vmax.f32 %v1134, %v1138
        %v1145 = vrot.slane %v1060, 6
        %v1146 = vrot.slane %v1061, 6
        %v1147 = vsel %vm371, %v1145, %v1146
        %v1151 = vsel %vm371, 0.0, %v1145
        %v1152 = vsel %vm371, %v1146, 0.0
        %v1153 = vmax.f32 %v1060, %v1151
        %v1154 = vmax.f32 %v1061, %v1147
        %v1157 = vrot.slane %v1151, 1
        %v1158 = vrot.slane %v1147, 1
        %v1159 = vsel %vm384, %v1157, %v1158
        %v1160 = vrot.slane %v1152, 1
        %v1161 = vsel %vm384, %v1158, %v1160
        %v1164 = vmax.f32 %v1153, %v1159
        %v1165 = vmax.f32 %v1154, %v1161
        %v1166 = vrot.slane %v1151, 3
        %v1167 = vrot.slane %v1147, 3
        %v1168 = vsel %vm394, %v1166, %v1167
        %v1169 = vrot.slane %v1152, 3
        %v1170 = vsel %vm394, %v1167, %v1169
        %v1173 = vmax.f32 %v1164, %v1168
        %v1174 = vmax.f32 %v1165, %v1170
        %v1175 = vrot.slane %v1151, 4
        %v1176 = vrot.slane %v1147, 4
        %v1177 = vsel %vm404, %v1175, %v1176
        %v1178 = vrot.slane %v1152, 4
        %v1179 = vsel %vm404, %v1176, %v1178
        %v1182 = vmax.f32 %v1173, %v1177
        %v1183 = vmax.f32 %v1174, %v1179
        %1186 = vrot.lane.b32.xlu0 %v1182, 2
        %v1187 = vpop.permute.xlu0 %1186
        %1188 = vrot.lane.b32.xlu0 %v1183, 2
        %v1189 = vpop.permute.xlu0 %1188
        %v1192 = vsel %vm422, 0.0, %v1187
        %v1193 = vsel %vm422, 0.0, %v1189
        %v1194 = vsel %vm425, %v1192, 0.0
        %v1195 = vsel %vm425, %v1193, 0.0
        %v1196 = vmax.f32 %v1182, %v1194
        %v1197 = vmax.f32 %v1183, %v1195
        %1200 = vrot.lane.b32.xlu0 %v1194, 127
        %v1201 = vpop.permute.xlu0 %1200
        %1202 = vrot.lane.b32.xlu0 %v1195, 127
        %v1203 = vpop.permute.xlu0 %1202
        %v1206 = vmax.f32 %v1196, %v1201
        %v1207 = vmax.f32 %v1197, %v1203
        %1208 = vrot.lane.b32.xlu0 %v1194, 125
        %v1209 = vpop.permute.xlu0 %1208
        %1210 = vrot.lane.b32.xlu0 %v1195, 125
        %v1211 = vpop.permute.xlu0 %1210
        %v1214 = vmax.f32 %v1206, %v1209
        %v1215 = vmax.f32 %v1207, %v1211
        %1216 = vrot.lane.b32.xlu0 %v1194, 124
        %v1217 = vpop.permute.xlu0 %1216
        %1218 = vrot.lane.b32.xlu0 %v1195, 124
        %v1219 = vpop.permute.xlu0 %1218
        %v1222 = vmax.f32 %v1214, %v1217
        %v1223 = vmax.f32 %v1215, %v1219
        %v1224 = vmul.f32 %v1060, %v1141
        %v1225 = vmul.f32 %v1061, %v1142
        %v1226 = vsel %vm539, %v1224, 0.0
        %v1227 = vsel %vm539, %v1225, 0.0
        %v1228 = vadd.f32 %v1226, %v1227
        %1229 = vadd.xlane.f32.xlu0 %v1228
        %v1230 = vpop.xlane.xlu0 %1229
        %v1231 = vrot.slane %v1230, 4
        %v1232 = vadd.f32 %v1230, %v1231
        %v1233 = vrot.slane %v1232, 2
        %v1234 = vadd.f32 %v1232, %v1233
        %v1235 = vrot.slane %v1234, 1
        %v1236 = vadd.f32 %v1234, %v1235
        %s1237 = vtos %v1236
        %v1238 = vsel %vm539, %v1060, 0.0
        %v1239 = vsel %vm539, %v1061, 0.0
        %v1240 = vadd.f32 %v1238, %v1239
        %1241 = vadd.xlane.f32.xlu0 %v1240
        %v1242 = vpop.xlane.xlu0 %1241
        %v1243 = vrot.slane %v1242, 4
        %v1244 = vadd.f32 %v1242, %v1243
        %v1245 = vrot.slane %v1244, 2
        %v1246 = vadd.f32 %v1244, %v1245
        %v1247 = vrot.slane %v1246, 1
        %v1248 = vadd.f32 %v1246, %v1247
        %s1249 = vtos %v1248
        %s1250 = sadd.f32 %s1249, 1e-07
        %v1251 = vstv %s1250
        %v1252 = vrcp.pop %v1251
        %s1253 = vtos %v1252
        %s1254 = smul.f32 %s1237, %s1253
        %v1255 = vmul.f32 %v1222, %v1011
        %v1256 = vmul.f32 %v1223, %v1012
        %v1257 = vsel %vm539, %v1255, 0.0
        %v1258 = vsel %vm539, %v1256, 0.0
        %v1259 = vadd.f32 %v1257, %v1258
        %1260 = vadd.xlane.f32.xlu0 %v1259
        %v1261 = vpop.xlane.xlu0 %1260
        %v1262 = vrot.slane %v1261, 4
        %v1263 = vadd.f32 %v1261, %v1262
        %v1264 = vrot.slane %v1263, 2
        %v1265 = vadd.f32 %v1263, %v1264
        %v1266 = vrot.slane %v1265, 1
        %v1267 = vadd.f32 %v1265, %v1266
        %s1268 = vtos %v1267
        %v1269 = vsel %vm539, %v1011, 0.0
        %v1270 = vsel %vm539, %v1012, 0.0
        %v1271 = vadd.f32 %v1269, %v1270
        %1272 = vadd.xlane.f32.xlu0 %v1271
        %v1273 = vpop.xlane.xlu0 %1272
        %v1274 = vrot.slane %v1273, 4
        %v1275 = vadd.f32 %v1273, %v1274
        %v1276 = vrot.slane %v1275, 2
        %v1277 = vadd.f32 %v1275, %v1276
        %v1278 = vrot.slane %v1277, 1
        %v1279 = vadd.f32 %v1277, %v1278
        %s1280 = vtos %v1279
        %s1281 = sadd.f32 %s1280, 1e-07
        %v1282 = vstv %s1281
        %v1283 = vrcp.pop %v1282
        %s1284 = vtos %v1283
        %s1285 = smul.f32 %s1268, %s1284
        %s1286 = smul.f32 %s1254, 2.0
        %s1287 = smul.f32 %s1286, %s1285
        %s1288 = sadd.f32 %s1254, %s1285
        %s1289 = sadd.f32 %s1288, 1e-07
        %v1290 = vstv %s1289
        %v1291 = vrcp.pop %v1290
        %s1292 = vtos %v1291
        %s1293 = smul.f32 %s1287, %s1292
        %s1294 = sadd.f32 %s951, %s1293
        %v1295 = vmul.f32 %v246, %v251
        %v1296 = vmul.f32 %v248, %v252
        %vm1297 = vcmp.eq.s32.totalorder %v253, 3
        %vm1298 = vcmp.eq.s32.totalorder %v254, 3
        %v1299 = vsel %vm1297, 1, 0
        %v1300 = vsel %vm1298, 1, 0
        %v1301 = vcvt.s32.f32 %v1299
        %v1302 = vcvt.s32.f32 %v1300
        %v1303 = vsub.f32 1.0, %v1301
        %v1304 = vsub.f32 1.0, %v1302
        %v1305 = vsub.f32 1.0, %v1295
        %v1306 = vsub.f32 1.0, %v1296
        %v1309 = vrot.slane %v1303, 7
        %v1310 = vrot.slane %v1304, 7
        %v1311 = vsel %vm269, %v1309, %v1310
        %v1315 = vsel %vm269, 0.0, %v1309
        %v1316 = vsel %vm269, %v1310, 0.0
        %v1317 = vmax.f32 %v1303, %v1315
        %v1318 = vmax.f32 %v1304, %v1311
        %v1321 = vrot.slane %v1315, 2
        %v1322 = vrot.slane %v1311, 2
        %v1323 = vsel %vm282, %v1321, %v1322
        %v1324 = vrot.slane %v1316, 2
        %v1325 = vsel %vm282, %v1322, %v1324
        %v1328 = vmax.f32 %v1317, %v1323
        %v1329 = vmax.f32 %v1318, %v1325
        %1332 = vrot.lane.b32.xlu0 %v1328, 1
        %v1333 = vpop.permute.xlu0 %1332
        %1334 = vrot.lane.b32.xlu0 %v1329, 1
        %v1335 = vpop.permute.xlu0 %1334
        %v1338 = vsel %vm300, 0.0, %v1333
        %v1339 = vsel %vm300, 0.0, %v1335
        %v1340 = vsel %vm303, %v1338, 0.0
        %v1341 = vsel %vm303, %v1339, 0.0
        %v1342 = vmax.f32 %v1328, %v1340
        %v1343 = vmax.f32 %v1329, %v1341
        %1346 = vrot.lane.b32.xlu0 %v1340, 126
        %v1347 = vpop.permute.xlu0 %1346
        %1348 = vrot.lane.b32.xlu0 %v1341, 126
        %v1349 = vpop.permute.xlu0 %1348
        %v1352 = vmax.f32 %v1342, %v1347
        %v1353 = vmax.f32 %v1343, %v1349
        %v1354 = vsub.f32 %v1352, %v1303
        %v1355 = vsub.f32 %v1353, %v1304
        %v1358 = vrot.slane %v1305, 7
        %v1359 = vrot.slane %v1306, 7
        %v1360 = vsel %vm269, %v1358, %v1359
        %v1364 = vsel %vm269, 0.0, %v1358
        %v1365 = vsel %vm269, %v1359, 0.0
        %v1366 = vmax.f32 %v1305, %v1364
        %v1367 = vmax.f32 %v1306, %v1360
        %v1370 = vrot.slane %v1364, 2
        %v1371 = vrot.slane %v1360, 2
        %v1372 = vsel %vm282, %v1370, %v1371
        %v1373 = vrot.slane %v1365, 2
        %v1374 = vsel %vm282, %v1371, %v1373
        %v1377 = vmax.f32 %v1366, %v1372
        %v1378 = vmax.f32 %v1367, %v1374
        %1381 = vrot.lane.b32.xlu0 %v1377, 1
        %v1382 = vpop.permute.xlu0 %1381
        %1383 = vrot.lane.b32.xlu0 %v1378, 1
        %v1384 = vpop.permute.xlu0 %1383
        %v1387 = vsel %vm300, 0.0, %v1382
        %v1388 = vsel %vm300, 0.0, %v1384
        %v1389 = vsel %vm303, %v1387, 0.0
        %v1390 = vsel %vm303, %v1388, 0.0
        %v1391 = vmax.f32 %v1377, %v1389
        %v1392 = vmax.f32 %v1378, %v1390
        %1395 = vrot.lane.b32.xlu0 %v1389, 126
        %v1396 = vpop.permute.xlu0 %1395
        %1397 = vrot.lane.b32.xlu0 %v1390, 126
        %v1398 = vpop.permute.xlu0 %1397
        %v1401 = vmax.f32 %v1391, %v1396
        %v1402 = vmax.f32 %v1392, %v1398
        %v1403 = vsub.f32 %v1401, %v1305
        %v1404 = vsub.f32 %v1402, %v1306
        %v1407 = vrot.slane %v1354, 6
        %v1408 = vrot.slane %v1355, 6
        %v1409 = vsel %vm371, %v1407, %v1408
        %v1413 = vsel %vm371, 0.0, %v1407
        %v1414 = vsel %vm371, %v1408, 0.0
        %v1415 = vmax.f32 %v1354, %v1413
        %v1416 = vmax.f32 %v1355, %v1409
        %v1419 = vrot.slane %v1413, 1
        %v1420 = vrot.slane %v1409, 1
        %v1421 = vsel %vm384, %v1419, %v1420
        %v1422 = vrot.slane %v1414, 1
        %v1423 = vsel %vm384, %v1420, %v1422
        %v1426 = vmax.f32 %v1415, %v1421
        %v1427 = vmax.f32 %v1416, %v1423
        %v1428 = vrot.slane %v1413, 3
        %v1429 = vrot.slane %v1409, 3
        %v1430 = vsel %vm394, %v1428, %v1429
        %v1431 = vrot.slane %v1414, 3
        %v1432 = vsel %vm394, %v1429, %v1431
        %v1435 = vmax.f32 %v1426, %v1430
        %v1436 = vmax.f32 %v1427, %v1432
        %v1437 = vrot.slane %v1413, 4
        %v1438 = vrot.slane %v1409, 4
        %v1439 = vsel %vm404, %v1437, %v1438
        %v1440 = vrot.slane %v1414, 4
        %v1441 = vsel %vm404, %v1438, %v1440
        %v1444 = vmax.f32 %v1435, %v1439
        %v1445 = vmax.f32 %v1436, %v1441
        %1448 = vrot.lane.b32.xlu0 %v1444, 2
        %v1449 = vpop.permute.xlu0 %1448
        %1450 = vrot.lane.b32.xlu0 %v1445, 2
        %v1451 = vpop.permute.xlu0 %1450
        %v1454 = vsel %vm422, 0.0, %v1449
        %v1455 = vsel %vm422, 0.0, %v1451
        %v1456 = vsel %vm425, %v1454, 0.0
        %v1457 = vsel %vm425, %v1455, 0.0
        %v1458 = vmax.f32 %v1444, %v1456
        %v1459 = vmax.f32 %v1445, %v1457
        %1462 = vrot.lane.b32.xlu0 %v1456, 127
        %v1463 = vpop.permute.xlu0 %1462
        %1464 = vrot.lane.b32.xlu0 %v1457, 127
        %v1465 = vpop.permute.xlu0 %1464
        %v1468 = vmax.f32 %v1458, %v1463
        %v1469 = vmax.f32 %v1459, %v1465
        %1470 = vrot.lane.b32.xlu0 %v1456, 125
        %v1471 = vpop.permute.xlu0 %1470
        %1472 = vrot.lane.b32.xlu0 %v1457, 125
        %v1473 = vpop.permute.xlu0 %1472
        %v1476 = vmax.f32 %v1468, %v1471
        %v1477 = vmax.f32 %v1469, %v1473
        %1478 = vrot.lane.b32.xlu0 %v1456, 124
        %v1479 = vpop.permute.xlu0 %1478
        %1480 = vrot.lane.b32.xlu0 %v1457, 124
        %v1481 = vpop.permute.xlu0 %1480
        %v1484 = vmax.f32 %v1476, %v1479
        %v1485 = vmax.f32 %v1477, %v1481
        %v1488 = vrot.slane %v1403, 6
        %v1489 = vrot.slane %v1404, 6
        %v1490 = vsel %vm371, %v1488, %v1489
        %v1494 = vsel %vm371, 0.0, %v1488
        %v1495 = vsel %vm371, %v1489, 0.0
        %v1496 = vmax.f32 %v1403, %v1494
        %v1497 = vmax.f32 %v1404, %v1490
        %v1500 = vrot.slane %v1494, 1
        %v1501 = vrot.slane %v1490, 1
        %v1502 = vsel %vm384, %v1500, %v1501
        %v1503 = vrot.slane %v1495, 1
        %v1504 = vsel %vm384, %v1501, %v1503
        %v1507 = vmax.f32 %v1496, %v1502
        %v1508 = vmax.f32 %v1497, %v1504
        %v1509 = vrot.slane %v1494, 3
        %v1510 = vrot.slane %v1490, 3
        %v1511 = vsel %vm394, %v1509, %v1510
        %v1512 = vrot.slane %v1495, 3
        %v1513 = vsel %vm394, %v1510, %v1512
        %v1516 = vmax.f32 %v1507, %v1511
        %v1517 = vmax.f32 %v1508, %v1513
        %v1518 = vrot.slane %v1494, 4
        %v1519 = vrot.slane %v1490, 4
        %v1520 = vsel %vm404, %v1518, %v1519
        %v1521 = vrot.slane %v1495, 4
        %v1522 = vsel %vm404, %v1519, %v1521
        %v1525 = vmax.f32 %v1516, %v1520
        %v1526 = vmax.f32 %v1517, %v1522
        %1529 = vrot.lane.b32.xlu0 %v1525, 2
        %v1530 = vpop.permute.xlu0 %1529
        %1531 = vrot.lane.b32.xlu0 %v1526, 2
        %v1532 = vpop.permute.xlu0 %1531
        %v1535 = vsel %vm422, 0.0, %v1530
        %v1536 = vsel %vm422, 0.0, %v1532
        %v1537 = vsel %vm425, %v1535, 0.0
        %v1538 = vsel %vm425, %v1536, 0.0
        %v1539 = vmax.f32 %v1525, %v1537
        %v1540 = vmax.f32 %v1526, %v1538
        %1543 = vrot.lane.b32.xlu0 %v1537, 127
        %v1544 = vpop.permute.xlu0 %1543
        %1545 = vrot.lane.b32.xlu0 %v1538, 127
        %v1546 = vpop.permute.xlu0 %1545
        %v1549 = vmax.f32 %v1539, %v1544
        %v1550 = vmax.f32 %v1540, %v1546
        %1551 = vrot.lane.b32.xlu0 %v1537, 125
        %v1552 = vpop.permute.xlu0 %1551
        %1553 = vrot.lane.b32.xlu0 %v1538, 125
        %v1554 = vpop.permute.xlu0 %1553
        %v1557 = vmax.f32 %v1549, %v1552
        %v1558 = vmax.f32 %v1550, %v1554
        %1559 = vrot.lane.b32.xlu0 %v1537, 124
        %v1560 = vpop.permute.xlu0 %1559
        %1561 = vrot.lane.b32.xlu0 %v1538, 124
        %v1562 = vpop.permute.xlu0 %1561
        %v1565 = vmax.f32 %v1557, %v1560
        %v1566 = vmax.f32 %v1558, %v1562
        %v1567 = vmul.f32 %v1403, %v1484
        %v1568 = vmul.f32 %v1404, %v1485
        %v1569 = vsel %vm539, %v1567, 0.0
        %v1570 = vsel %vm539, %v1568, 0.0
        %v1571 = vadd.f32 %v1569, %v1570
        %1572 = vadd.xlane.f32.xlu0 %v1571
        %v1573 = vpop.xlane.xlu0 %1572
        %v1574 = vrot.slane %v1573, 4
        %v1575 = vadd.f32 %v1573, %v1574
        %v1576 = vrot.slane %v1575, 2
        %v1577 = vadd.f32 %v1575, %v1576
        %v1578 = vrot.slane %v1577, 1
        %v1579 = vadd.f32 %v1577, %v1578
        %s1580 = vtos %v1579
        %v1581 = vsel %vm539, %v1403, 0.0
        %v1582 = vsel %vm539, %v1404, 0.0
        %v1583 = vadd.f32 %v1581, %v1582
        %1584 = vadd.xlane.f32.xlu0 %v1583
        %v1585 = vpop.xlane.xlu0 %1584
        %v1586 = vrot.slane %v1585, 4
        %v1587 = vadd.f32 %v1585, %v1586
        %v1588 = vrot.slane %v1587, 2
        %v1589 = vadd.f32 %v1587, %v1588
        %v1590 = vrot.slane %v1589, 1
        %v1591 = vadd.f32 %v1589, %v1590
        %s1592 = vtos %v1591
        %s1593 = sadd.f32 %s1592, 1e-07
        %v1594 = vstv %s1593
        %v1595 = vrcp.pop %v1594
        %s1596 = vtos %v1595
        %s1597 = smul.f32 %s1580, %s1596
        %v1598 = vmul.f32 %v1565, %v1354
        %v1599 = vmul.f32 %v1566, %v1355
        %v1600 = vsel %vm539, %v1598, 0.0
        %v1601 = vsel %vm539, %v1599, 0.0
        %v1602 = vadd.f32 %v1600, %v1601
        %1603 = vadd.xlane.f32.xlu0 %v1602
        %v1604 = vpop.xlane.xlu0 %1603
        %v1605 = vrot.slane %v1604, 4
        %v1606 = vadd.f32 %v1604, %v1605
        %v1607 = vrot.slane %v1606, 2
        %v1608 = vadd.f32 %v1606, %v1607
        %v1609 = vrot.slane %v1608, 1
        %v1610 = vadd.f32 %v1608, %v1609
        %s1611 = vtos %v1610
        %v1612 = vsel %vm539, %v1354, 0.0
        %v1613 = vsel %vm539, %v1355, 0.0
        %v1614 = vadd.f32 %v1612, %v1613
        %1615 = vadd.xlane.f32.xlu0 %v1614
        %v1616 = vpop.xlane.xlu0 %1615
        %v1617 = vrot.slane %v1616, 4
        %v1618 = vadd.f32 %v1616, %v1617
        %v1619 = vrot.slane %v1618, 2
        %v1620 = vadd.f32 %v1618, %v1619
        %v1621 = vrot.slane %v1620, 1
        %v1622 = vadd.f32 %v1620, %v1621
        %s1623 = vtos %v1622
        %s1624 = sadd.f32 %s1623, 1e-07
        %v1625 = vstv %s1624
        %v1626 = vrcp.pop %v1625
        %s1627 = vtos %v1626
        %s1628 = smul.f32 %s1611, %s1627
        %s1629 = smul.f32 %s1597, 2.0
        %s1630 = smul.f32 %s1629, %s1628
        %s1631 = sadd.f32 %s1597, %s1628
        %s1632 = sadd.f32 %s1631, 1e-07
        %v1633 = vstv %s1632
        %v1634 = vrcp.pop %v1633
        %s1635 = vtos %v1634
        %s1636 = smul.f32 %s1630, %s1635
        %s1637 = sadd.f32 %s1294, %s1636
        %v1638 = vstv %s1637
        %1639 = vst [vmem:[%s201] sm:$0xff] %v1638
        %s1640 = sand.u32 %s82, 1
        %s1641 = scalar_lea.sflag [#allocation4], %s1640
        %s1642 = sand.u32 %s82, 1
        %s1643 = smul.addr %s1642, 8
        %s1644 = scalar_lea.vmem [#allocation7], %s1643
        // Predicated region
        $region37: #{tpu_custom_call.1} parent=27 // pred_check
          %p1645 = pneg %p92
        $region38: #{tpu_custom_call.1} parent=27 // pred_check_branch
          %1647 = sbr.rel (%p1645) target = $region40
        $region39: #{tpu_custom_call.1} parent=27 // pred_region
          %s1649 = ssub.s32 128, 128
          %1650 = vsyncadd %s1641, %s1649
          %s1651 = smul.addr %s22, 128
          %s1652 = scalar_lea.hbm %s2, %s1651
          %s1654 = sshll.u32 %s1644, 4
          %s1655 = int_to_ptr.vmem [resolvable:$true] %s1654
          %1657 = dma.vmem_to_hbm [thread:$0]  %s1655, 128, %s1652, %s1641
        $region40: #{tpu_custom_call.1} parent=27 // pred_fallthru
          _
      $region28: #{tpu_custom_call.1} parent=5 // pred_fallthru
        _
      %p1658 = scmp.le.s32.totalorder 2, %s17
      // Predicated region
      $region41: #{tpu_custom_call.1} parent=5 // pred_check
        %p1659 = pneg %p1658
      $region42: #{tpu_custom_call.1} parent=5 // pred_check_branch
        %1661 = sbr.rel (%p1659) target = $region44
      $region43: #{tpu_custom_call.1} parent=5 // pred_region
        %s1662 = ssub.s32 %s17, 2
        // Predicated region
        $region45: #{tpu_custom_call.1} parent=43 // pred_check
          %p1663 = pneg %p98
        $region46: #{tpu_custom_call.1} parent=43 // pred_check_branch
          %1665 = sbr.rel (%p1663) target = $region48
        $region47: #{tpu_custom_call.1} parent=43 // pred_region
          %s1666 = sand.u32 %s83, 1
          %s1667 = scalar_lea.sflag [#allocation4], %s1666
          %s1668 = sand.u32 %s83, 1
          %s1669 = smul.addr %s1668, 8
          %s1670 = scalar_lea.vmem [#allocation7], %s1669
          %1671 = dma.done %s1667, 128
        $region48: #{tpu_custom_call.1} parent=43 // pred_fallthru
          _
      $region44: #{tpu_custom_call.1} parent=5 // pred_fallthru
        _
    $region6: #{tpu_custom_call.1} parent=1 // loop_footer
      %s21 = sadd.s32 1, %s17
    $region7: #{tpu_custom_call.1} parent=1 // loop_footer_branch
      %16 = sbr.rel target = $region3
    $region8: #{tpu_custom_call.1} parent=1 // loop_exit
      _
    %1672 = vsyncpa [#allocation3], 1
    %s1673 = scalar_lea.sflag [#allocation3], 1
    %1674 = vsyncpa %s1673, 1
    %1675 = vsyncpa [#allocation6], 1
    %s1676 = scalar_lea.sflag [#allocation6], 1
    %1677 = vsyncpa %s1676, 1
    %1678 = vsyncpa [#allocation4], 1
    %s1679 = scalar_lea.sflag [#allocation4], 1
    %1680 = vsyncpa %s1679, 1

</llo_original>
